<compile_context>
chip_gen: v7x
topology: tpu7x:2x2x1
jax: 0.10.0
libtpu: 0.0.40
codegen_flags: <defaults>
</compile_context>

<pallas_src>
import jax
import jax.numpy as jnp
from jax import lax
from jax.experimental import pallas as pl
from jax.experimental.pallas import tpu as pltpu  # noqa: F401  (not required at this size)

NEG_INF = -1e30  # additive mask value (softmax-safe; the CLS key is never masked)
LN_EPS = 1e-5    # nn.TransformerEncoderLayer default layer_norm_eps


def _leaky(x, slope=0.2):
    # leaky_relu(x, 0.2), matching the module's activation
    return jnp.where(x >= 0, x, slope * x)


def _layernorm(x, w, b):
    mu = jnp.mean(x, axis=-1, keepdims=True)
    var = jnp.mean((x - mu) ** 2, axis=-1, keepdims=True)
    return (x - mu) * lax.rsqrt(var + LN_EPS) * w + b


# ----------------------------- fused Pallas kernel ---------------------------

def make_disc_kernel(B, N, n_dim, D, num_layers):
    """Builds the fully fused Disc forward kernel (eval semantics)."""
    S = N + 1          # sequence length with prepended CLS token
    M = B * S          # batch-flattened row count
    scale = 1.0 / (float(D) ** 0.5)

    def kernel(*refs):
        it = iter(refs)
        xp_ref   = next(it)   # (M, n_dim)  inputs, zero rows at CLS slots
        rowm_ref = next(it)   # (M, 1)      0.0 at CLS rows, 1.0 elsewhere
        madd_ref = next(it)   # (M, M)      block-diag + key-padding additive mask
        sel_ref  = next(it)   # (B, M)      one-hot CLS-row selector
        ew_ref   = next(it)   # (n_dim, D)  embed weight
        eb_ref   = next(it)   # (1, D)      embed bias
        layer_refs = [[next(it) for _ in range(12)] for _ in range(num_layers)]
        hw1, hb1, hw2, hb2, ow, ob = (next(it) for _ in range(6))
        o_ref = next(it)      # (B, 1) output logits

        # ---- embed: (M, n_dim) @ (n_dim, D) as n_dim VPU FMAs (a K=3 MXU
        #      pass would be >97% padding).  PyTorch prepends zero CLS rows
        #      *after* the embed, hence the row mask (kills the bias too). ----
        xp = xp_ref[...]
        emb = jnp.broadcast_to(eb_ref[...], (M, D))
        for c in range(n_dim):
            emb = emb + xp[:, c:c + 1] * ew_ref[c:c + 1, :]
        h = emb * rowm_ref[...]                 # (M, D), CLS rows zeroed

        madd = madd_ref[...]                    # (M, M)

        # ---- encoder layers (post-norm, nhead=1, eval: dropout = identity) ----
        # TODO(synk): dropout(p=0.5) is stochastic; eval-mode identity is used.
        for (wqkv, bqkv, wo, bo, ln1w, ln1b,
             w1, b1, w2, b2, ln2w, ln2b) in layer_refs:
            # packed QKV projection over the whole flattened batch
            qkv = jnp.dot(h, wqkv[...], preferred_element_type=jnp.float32) + bqkv[...]
            q = qkv[:, 0:D]
            k = qkv[:, D:2 * D]
            v = qkv[:, 2 * D:3 * D]

            # single fused attention over all M = B*S rows; the additive mask
            # is block-diagonal over batches and -inf on padded keys, so this
            # equals per-batch attention exactly.
            sc = lax.dot_general(q, k, (((1,), (1,)), ((), ())),
                                 preferred_element_type=jnp.float32)
            sc = sc * scale + madd                                  # (M, M)
            mrow = jnp.max(sc, axis=-1, keepdims=True)
            e = jnp.exp(sc - mrow)
            p = e * pl.reciprocal(jnp.sum(e, axis=-1, keepdims=True), approx=True)
            attn = jnp.dot(p, v, preferred_element_type=jnp.float32)          # (M, D)
            attn = jnp.dot(attn, wo[...], preferred_element_type=jnp.float32) + bo[...]

            # residual + LayerNorm1 (norm_first=False => post-norm)
            x1 = _layernorm(h + attn, ln1w[...], ln1b[...])

            # feed-forward with leaky_relu(0.2)
            ff = _leaky(jnp.dot(x1, w1[...], preferred_element_type=jnp.float32) + b1[...])
            ff = jnp.dot(ff, w2[...], preferred_element_type=jnp.float32) + b2[...]

            # residual + LayerNorm2
            h = _layernorm(x1 + ff, ln2w[...], ln2b[...])

        # ---- CLS rows via one-hot selection matmul, then MLP head ----
        cls = jnp.dot(sel_ref[...], h, preferred_element_type=jnp.float32)    # (B, D)
        z = _leaky(jnp.dot(cls, hw1[...], preferred_element_type=jnp.float32) + hb1[...])
        z = _leaky(jnp.dot(z, hw2[...], preferred_element_type=jnp.float32) + hb2[...])
        o_ref[...] = jnp.dot(z, ow[...], preferred_element_type=jnp.float32) + ob[...]

    return kernel


# --------------------------------- wrapper -----------------------------------

_LAYER_ORDER = ("wqkv", "bqkv", "wo", "bo", "ln1w", "ln1b",
                "w1", "b1", "w2", "b2", "ln2w", "ln2b")


@jax.jit
def disc_forward(params, x, mask):
    """Mirrors Disc.forward (eval mode). x: (B, N, n_dim); mask: (B, N) bool,
    True = padded (ignored key)."""
    B, N, n_dim = x.shape
    D = params["embed_w"].shape[1]
    num_layers = len(params["layers"])
    S = N + 1
    M = B * S

    # Tiny one-time host/XLA glue (constant-shaped, negligible):
    # inputs with zero rows inserted at the CLS slots
    xp = jnp.concatenate([jnp.zeros((B, 1, n_dim), jnp.float32),
                          x.astype(jnp.float32)], axis=1).reshape(M, n_dim)
    # 0 at CLS rows (PyTorch prepends zeros AFTER the embed), 1 elsewhere
    rowm = jnp.where((jnp.arange(M) % S) == 0, 0.0, 1.0
                     ).astype(jnp.float32).reshape(M, 1)
    # additive attention mask: block-diagonal over batches + key padding
    key_pad = jnp.concatenate([jnp.zeros((B, 1), bool), mask.astype(bool)],
                              axis=1).reshape(M)                     # True = padded
    batch_ids = jnp.repeat(jnp.arange(B), S)
    allowed = (batch_ids[:, None] == batch_ids[None, :]) & (~key_pad)[None, :]
    madd = jnp.where(allowed, 0.0, NEG_INF).astype(jnp.float32)       # (M, M)
    # one-hot selector for the CLS row of each batch
    sel = jax.nn.one_hot(jnp.arange(B) * S, M, dtype=jnp.float32)     # (B, M)

    args = [xp, rowm, madd, sel, params["embed_w"], params["embed_b"]]
    for lp in params["layers"]:
        args += [lp[n] for n in _LAYER_ORDER]
    args += [params["hw1"], params["hb1"], params["hw2"], params["hb2"],
             params["ow"], params["ob"]]

    kernel = make_disc_kernel(B, N, n_dim, D, num_layers)
    return pl.pallas_call(
        kernel,
        out_shape=jax.ShapeDtypeStruct((B, 1), jnp.float32),
    )(*args)


# ------------------------------ parameters ------------------------------------

def init_params(key, n_dim=3, l_dim=10, hidden=32, num_layers=2):
    """Deterministic synthetic init (PyTorch-style uniform(-1/sqrt(in), 1/sqrt(in))).
    Weights stored (in_features, out_features); QKV in_proj stored packed (D, 3D)."""
    def lin(k, in_f, out_f):
        kw, kb = jax.random.split(k)
        bound = 1.0 / (in_f ** 0.5)
        w = jax.random.uniform(kw, (in_f, out_f), jnp.float32, -bound, bound)
        b = jax.random.uniform(kb, (1, out_f), jnp.float32, -bound, bound)
        return w, b

    keys = jax.random.split(key, 4 + num_layers)
    p = {}
    p["embed_w"], p["embed_b"] = lin(keys[0], n_dim, l_dim)
    p["hw1"], p["hb1"] = lin(keys[1], l_dim, 2 * hidden)
    p["hw2"], p["hb2"] = lin(keys[2], 2 * hidden, hidden)
    p["ow"], p["ob"] = lin(keys[3], hidden, 1)
    layers = []
    for i in range(num_layers):
        lk = jax.random.split(keys[4 + i], 4)
        wqkv, bqkv = lin(lk[0], l_dim, 3 * l_dim)   # packed in_proj (q|k|v)
        wo, bo = lin(lk[1], l_dim, l_dim)
        w1, b1 = lin(lk[2], l_dim, hidden)
        w2, b2 = lin(lk[3], hidden, l_dim)
        layers.append(dict(
            wqkv=wqkv, bqkv=bqkv, wo=wo, bo=bo,
            ln1w=jnp.ones((1, l_dim), jnp.float32), ln1b=jnp.zeros((1, l_dim), jnp.float32),
            ln2w=jnp.ones((1, l_dim), jnp.float32), ln2b=jnp.zeros((1, l_dim), jnp.float32),
            w1=w1, b1=b1, w2=w2, b2=b2))
    p["layers"] = layers
    return p


# ------------------------------ plain-JAX reference ---------------------------

def reference_forward(params, x, mask):
    B = x.shape[0]
    D = params["embed_w"].shape[1]
    h = jnp.einsum("bnc,cd->bnd", x, params["embed_w"]) + params["embed_b"][None]
    h = jnp.concatenate([jnp.zeros((B, 1, D), jnp.float32), h], axis=1)
    m = jnp.concatenate([jnp.zeros((B, 1), bool), mask.astype(bool)], axis=1)
    madd = jnp.where(m, NEG_INF, 0.0)[:, None, :]
    for lp in params["layers"]:
        qkv = h @ lp["wqkv"] + lp["bqkv"]
        q, k, v = qkv[..., :D], qkv[..., D:2 * D], qkv[..., 2 * D:]
        s = jnp.einsum("bqd,bkd->bqk", q, k) / (D ** 0.5) + madd
        a = jnp.einsum("bqk,bkd->bqd", jax.nn.softmax(s, axis=-1), v)
        a = a @ lp["wo"] + lp["bo"]
        x1 = h + a
        mu = x1.mean(-1, keepdims=True)
        var = ((x1 - mu) ** 2).mean(-1, keepdims=True)
        x1 = (x1 - mu) / jnp.sqrt(var + LN_EPS) * lp["ln1w"] + lp["ln1b"]
        ff = _leaky(x1 @ lp["w1"] + lp["b1"]) @ lp["w2"] + lp["b2"]
        x2 = x1 + ff
        mu = x2.mean(-1, keepdims=True)
        var = ((x2 - mu) ** 2).mean(-1, keepdims=True)
        h = (x2 - mu) / jnp.sqrt(var + LN_EPS) * lp["ln2w"] + lp["ln2b"]
    cls = h[:, 0, :]
    z = _leaky(cls @ params["hw1"] + params["hb1"])
    z = _leaky(z @ params["hw2"] + params["hb2"])
    return z @ params["ow"] + params["ob"]


# ---------------------------------- main ---------------------------------------

if __name__ == "__main__":
    key = jax.random.PRNGKey(0)
    kp, kx = jax.random.split(key)

    B, N, n_dim, l_dim, hidden, num_layers = 2, 8, 3, 10, 32, 2
    params = init_params(kp, n_dim=n_dim, l_dim=l_dim, hidden=hidden,
                         num_layers=num_layers)
    x = jax.random.normal(kx, (B, N, n_dim), jnp.float32)
    # padding mask (True = padded / ignored), as passed to Disc.forward
    mask = jnp.array([[False] * 6 + [True] * 2,
                      [False] * 8], dtype=bool)

    out = jax.block_until_ready(disc_forward(params, x, mask))
    ref = reference_forward(params, x, mask)

    assert out.shape == (B, 1), out.shape
    assert bool(jnp.all(jnp.isfinite(out)))
    assert bool(jnp.allclose(out, ref, rtol=2e-2, atol=2e-2)), (out, ref)
    print("KERNEL_OK")
</pallas_src>

<mosaic_0001>
module attributes {stable_mosaic.version = 11 : i64} {
  func.func @kernel(%arg0: memref<18x3xf32, #tpu.memory_space<vmem>>, %arg1: memref<18x1xf32, #tpu.memory_space<vmem>>, %arg2: memref<18x18xf32, #tpu.memory_space<vmem>>, %arg3: memref<2x18xf32, #tpu.memory_space<vmem>>, %arg4: memref<3x10xf32, #tpu.memory_space<vmem>>, %arg5: memref<1x10xf32, #tpu.memory_space<vmem>>, %arg6: memref<10x30xf32, #tpu.memory_space<vmem>>, %arg7: memref<1x30xf32, #tpu.memory_space<vmem>>, %arg8: memref<10x10xf32, #tpu.memory_space<vmem>>, %arg9: memref<1x10xf32, #tpu.memory_space<vmem>>, %arg10: memref<1x10xf32, #tpu.memory_space<vmem>>, %arg11: memref<1x10xf32, #tpu.memory_space<vmem>>, %arg12: memref<10x32xf32, #tpu.memory_space<vmem>>, %arg13: memref<1x32xf32, #tpu.memory_space<vmem>>, %arg14: memref<32x10xf32, #tpu.memory_space<vmem>>, %arg15: memref<1x10xf32, #tpu.memory_space<vmem>>, %arg16: memref<1x10xf32, #tpu.memory_space<vmem>>, %arg17: memref<1x10xf32, #tpu.memory_space<vmem>>, %arg18: memref<10x30xf32, #tpu.memory_space<vmem>>, %arg19: memref<1x30xf32, #tpu.memory_space<vmem>>, %arg20: memref<10x10xf32, #tpu.memory_space<vmem>>, %arg21: memref<1x10xf32, #tpu.memory_space<vmem>>, %arg22: memref<1x10xf32, #tpu.memory_space<vmem>>, %arg23: memref<1x10xf32, #tpu.memory_space<vmem>>, %arg24: memref<10x32xf32, #tpu.memory_space<vmem>>, %arg25: memref<1x32xf32, #tpu.memory_space<vmem>>, %arg26: memref<32x10xf32, #tpu.memory_space<vmem>>, %arg27: memref<1x10xf32, #tpu.memory_space<vmem>>, %arg28: memref<1x10xf32, #tpu.memory_space<vmem>>, %arg29: memref<1x10xf32, #tpu.memory_space<vmem>>, %arg30: memref<10x64xf32, #tpu.memory_space<vmem>>, %arg31: memref<1x64xf32, #tpu.memory_space<vmem>>, %arg32: memref<64x32xf32, #tpu.memory_space<vmem>>, %arg33: memref<1x32xf32, #tpu.memory_space<vmem>>, %arg34: memref<32x1xf32, #tpu.memory_space<vmem>>, %arg35: memref<1x1xf32, #tpu.memory_space<vmem>>, %arg36: memref<2x1xf32, #tpu.memory_space<vmem>>) attributes {dimension_semantics = [], scalar_prefetch = 0 : i64, scratch_operands = 0 : i64, tpu.core_type = #tpu.core_type<tc>} {
    %c0 = arith.constant 0 : index
    %c0_0 = arith.constant 0 : index
    %0 = vector.load %arg0[%c0, %c0_0] : memref<18x3xf32, #tpu.memory_space<vmem>>, vector<18x3xf32>
    %c0_1 = arith.constant 0 : index
    %c0_2 = arith.constant 0 : index
    %1 = vector.load %arg5[%c0_1, %c0_2] : memref<1x10xf32, #tpu.memory_space<vmem>>, vector<1x10xf32>
    %2 = vector.shape_cast %1 : vector<1x10xf32> to vector<1x10xf32>
    %3 = vector.broadcast %2 : vector<1x10xf32> to vector<18x10xf32>
    %4 = vector.extract_strided_slice %0 {offsets = [0, 0], sizes = [18, 1], strides = [1, 1]} : vector<18x3xf32> to vector<18x1xf32>
    %c0_3 = arith.constant 0 : index
    %c0_4 = arith.constant 0 : index
    %5 = vector.load %arg4[%c0_3, %c0_4] : memref<3x10xf32, #tpu.memory_space<vmem>>, vector<1x10xf32>
    %6 = vector.broadcast %4 : vector<18x1xf32> to vector<18x10xf32>
    %7 = vector.broadcast %5 : vector<1x10xf32> to vector<18x10xf32>
    %8 = arith.mulf %6, %7 : vector<18x10xf32>
    %9 = arith.addf %3, %8 : vector<18x10xf32>
    %10 = vector.extract_strided_slice %0 {offsets = [0, 1], sizes = [18, 1], strides = [1, 1]} : vector<18x3xf32> to vector<18x1xf32>
    %c1 = arith.constant 1 : index
    %c0_5 = arith.constant 0 : index
    %11 = vector.load %arg4[%c1, %c0_5] : memref<3x10xf32, #tpu.memory_space<vmem>>, vector<1x10xf32>
    %12 = vector.broadcast %10 : vector<18x1xf32> to vector<18x10xf32>
    %13 = vector.broadcast %11 : vector<1x10xf32> to vector<18x10xf32>
    %14 = arith.mulf %12, %13 : vector<18x10xf32>
    %15 = arith.addf %9, %14 : vector<18x10xf32>
    %16 = vector.extract_strided_slice %0 {offsets = [0, 2], sizes = [18, 1], strides = [1, 1]} : vector<18x3xf32> to vector<18x1xf32>
    %c2 = arith.constant 2 : index
    %c0_6 = arith.constant 0 : index
    %17 = vector.load %arg4[%c2, %c0_6] : memref<3x10xf32, #tpu.memory_space<vmem>>, vector<1x10xf32>
    %18 = vector.broadcast %16 : vector<18x1xf32> to vector<18x10xf32>
    %19 = vector.broadcast %17 : vector<1x10xf32> to vector<18x10xf32>
    %20 = arith.mulf %18, %19 : vector<18x10xf32>
    %21 = arith.addf %15, %20 : vector<18x10xf32>
    %c0_7 = arith.constant 0 : index
    %c0_8 = arith.constant 0 : index
    %22 = vector.load %arg1[%c0_7, %c0_8] : memref<18x1xf32, #tpu.memory_space<vmem>>, vector<18x1xf32>
    %23 = vector.broadcast %22 : vector<18x1xf32> to vector<18x10xf32>
    %24 = arith.mulf %21, %23 : vector<18x10xf32>
    %c0_9 = arith.constant 0 : index
    %c0_10 = arith.constant 0 : index
    %25 = vector.load %arg2[%c0_9, %c0_10] : memref<18x18xf32, #tpu.memory_space<vmem>>, vector<18x18xf32>
    %c0_11 = arith.constant 0 : index
    %c0_12 = arith.constant 0 : index
    %26 = vector.load %arg6[%c0_11, %c0_12] : memref<10x30xf32, #tpu.memory_space<vmem>>, vector<10x30xf32>
    %cst = arith.constant dense<0.000000e+00> : vector<18x30xf32>
    %27 = tpu.matmul %24, %26, %cst {dimension_numbers = #tpu.dot_dimension_numbers<[1], [0], [0], [1], [0, 0, 1, 1], [], []>} : vector<18x10xf32>, vector<10x30xf32>, vector<18x30xf32> -> vector<18x30xf32>
    %c0_13 = arith.constant 0 : index
    %c0_14 = arith.constant 0 : index
    %28 = vector.load %arg7[%c0_13, %c0_14] : memref<1x30xf32, #tpu.memory_space<vmem>>, vector<1x30xf32>
    %29 = vector.broadcast %28 : vector<1x30xf32> to vector<18x30xf32>
    %30 = arith.addf %27, %29 : vector<18x30xf32>
    %31 = vector.extract_strided_slice %30 {offsets = [0, 0], sizes = [18, 10], strides = [1, 1]} : vector<18x30xf32> to vector<18x10xf32>
    %32 = vector.extract_strided_slice %30 {offsets = [0, 10], sizes = [18, 10], strides = [1, 1]} : vector<18x30xf32> to vector<18x10xf32>
    %33 = vector.extract_strided_slice %30 {offsets = [0, 20], sizes = [18, 10], strides = [1, 1]} : vector<18x30xf32> to vector<18x10xf32>
    %cst_15 = arith.constant dense<0.000000e+00> : vector<18x18xf32>
    %34 = tpu.matmul %31, %32, %cst_15 {dimension_numbers = #tpu.dot_dimension_numbers<[1], [1], [0], [0], [0, 0, 1, 0], [], []>} : vector<18x10xf32>, vector<18x10xf32>, vector<18x18xf32> -> vector<18x18xf32>
    %cst_16 = arith.constant 0.316227764 : f32
    %35 = vector.broadcast %cst_16 : f32 to vector<18x18xf32>
    %36 = arith.mulf %34, %35 : vector<18x18xf32>
    %37 = arith.addf %36, %25 : vector<18x18xf32>
    %cst_17 = arith.constant dense<0xFF800000> : vector<18xf32>
    %38 = vector.multi_reduction <maximumf>, %37, %cst_17 [1] : vector<18x18xf32> to vector<18xf32>
    %39 = vector.shape_cast %38 : vector<18xf32> to vector<18x1xf32>
    %40 = vector.broadcast %39 : vector<18x1xf32> to vector<18x18xf32>
    %41 = arith.subf %37, %40 : vector<18x18xf32>
    %42 = math.exp %41 : vector<18x18xf32>
    %cst_18 = arith.constant dense<0.000000e+00> : vector<18xf32>
    %43 = vector.multi_reduction <add>, %42, %cst_18 [1] : vector<18x18xf32> to vector<18xf32>
    %44 = vector.shape_cast %43 : vector<18xf32> to vector<18x1xf32>
    %45 = tpu.reciprocal %44 {approx = true} : vector<18x1xf32> -> vector<18x1xf32>
    %46 = vector.broadcast %45 : vector<18x1xf32> to vector<18x18xf32>
    %47 = arith.mulf %42, %46 : vector<18x18xf32>
    %cst_19 = arith.constant dense<0.000000e+00> : vector<18x10xf32>
    %48 = tpu.matmul %47, %33, %cst_19 {dimension_numbers = #tpu.dot_dimension_numbers<[1], [0], [0], [1], [0, 0, 1, 1], [], []>} : vector<18x18xf32>, vector<18x10xf32>, vector<18x10xf32> -> vector<18x10xf32>
    %c0_20 = arith.constant 0 : index
    %c0_21 = arith.constant 0 : index
    %49 = vector.load %arg8[%c0_20, %c0_21] : memref<10x10xf32, #tpu.memory_space<vmem>>, vector<10x10xf32>
    %cst_22 = arith.constant dense<0.000000e+00> : vector<18x10xf32>
    %50 = tpu.matmul %48, %49, %cst_22 {dimension_numbers = #tpu.dot_dimension_numbers<[1], [0], [0], [1], [0, 0, 1, 1], [], []>} : vector<18x10xf32>, vector<10x10xf32>, vector<18x10xf32> -> vector<18x10xf32>
    %c0_23 = arith.constant 0 : index
    %c0_24 = arith.constant 0 : index
    %51 = vector.load %arg9[%c0_23, %c0_24] : memref<1x10xf32, #tpu.memory_space<vmem>>, vector<1x10xf32>
    %52 = vector.broadcast %51 : vector<1x10xf32> to vector<18x10xf32>
    %53 = arith.addf %50, %52 : vector<18x10xf32>
    %54 = arith.addf %24, %53 : vector<18x10xf32>
    %c0_25 = arith.constant 0 : index
    %c0_26 = arith.constant 0 : index
    %55 = vector.load %arg10[%c0_25, %c0_26] : memref<1x10xf32, #tpu.memory_space<vmem>>, vector<1x10xf32>
    %c0_27 = arith.constant 0 : index
    %c0_28 = arith.constant 0 : index
    %56 = vector.load %arg11[%c0_27, %c0_28] : memref<1x10xf32, #tpu.memory_space<vmem>>, vector<1x10xf32>
    %cst_29 = arith.constant dense<0.000000e+00> : vector<18xf32>
    %57 = vector.multi_reduction <add>, %54, %cst_29 [1] : vector<18x10xf32> to vector<18xf32>
    %58 = vector.shape_cast %57 : vector<18xf32> to vector<18x1xf32>
    %cst_30 = arith.constant 1.000000e+01 : f32
    %59 = vector.broadcast %cst_30 : f32 to vector<18x1xf32>
    %60 = arith.divf %58, %59 : vector<18x1xf32>
    %61 = vector.broadcast %60 : vector<18x1xf32> to vector<18x10xf32>
    %62 = arith.subf %54, %61 : vector<18x10xf32>
    %63 = arith.mulf %62, %62 : vector<18x10xf32>
    %cst_31 = arith.constant dense<0.000000e+00> : vector<18xf32>
    %64 = vector.multi_reduction <add>, %63, %cst_31 [1] : vector<18x10xf32> to vector<18xf32>
    %65 = vector.shape_cast %64 : vector<18xf32> to vector<18x1xf32>
    %cst_32 = arith.constant 1.000000e+01 : f32
    %66 = vector.broadcast %cst_32 : f32 to vector<18x1xf32>
    %67 = arith.divf %65, %66 : vector<18x1xf32>
    %68 = vector.broadcast %60 : vector<18x1xf32> to vector<18x10xf32>
    %69 = arith.subf %54, %68 : vector<18x10xf32>
    %cst_33 = arith.constant 9.99999974E-6 : f32
    %70 = vector.broadcast %cst_33 : f32 to vector<18x1xf32>
    %71 = arith.addf %67, %70 : vector<18x1xf32>
    %72 = math.rsqrt %71 : vector<18x1xf32>
    %73 = vector.broadcast %72 : vector<18x1xf32> to vector<18x10xf32>
    %74 = arith.mulf %69, %73 : vector<18x10xf32>
    %75 = vector.broadcast %55 : vector<1x10xf32> to vector<18x10xf32>
    %76 = arith.mulf %74, %75 : vector<18x10xf32>
    %77 = vector.broadcast %56 : vector<1x10xf32> to vector<18x10xf32>
    %78 = arith.addf %76, %77 : vector<18x10xf32>
    %c0_34 = arith.constant 0 : index
    %c0_35 = arith.constant 0 : index
    %79 = vector.load %arg12[%c0_34, %c0_35] : memref<10x32xf32, #tpu.memory_space<vmem>>, vector<10x32xf32>
    %cst_36 = arith.constant dense<0.000000e+00> : vector<18x32xf32>
    %80 = tpu.matmul %78, %79, %cst_36 {dimension_numbers = #tpu.dot_dimension_numbers<[1], [0], [0], [1], [0, 0, 1, 1], [], []>} : vector<18x10xf32>, vector<10x32xf32>, vector<18x32xf32> -> vector<18x32xf32>
    %c0_37 = arith.constant 0 : index
    %c0_38 = arith.constant 0 : index
    %81 = vector.load %arg13[%c0_37, %c0_38] : memref<1x32xf32, #tpu.memory_space<vmem>>, vector<1x32xf32>
    %82 = vector.broadcast %81 : vector<1x32xf32> to vector<18x32xf32>
    %83 = arith.addf %80, %82 : vector<18x32xf32>
    %cst_39 = arith.constant 0.000000e+00 : f32
    %84 = vector.broadcast %cst_39 : f32 to vector<18x32xf32>
    %85 = arith.cmpf oge, %83, %84 : vector<18x32xf32>
    %cst_40 = arith.constant 2.000000e-01 : f32
    %86 = vector.broadcast %cst_40 : f32 to vector<18x32xf32>
    %87 = arith.mulf %86, %83 : vector<18x32xf32>
    %88 = arith.select %85, %83, %87 : vector<18x32xi1>, vector<18x32xf32>
    %c0_41 = arith.constant 0 : index
    %c0_42 = arith.constant 0 : index
    %89 = vector.load %arg14[%c0_41, %c0_42] : memref<32x10xf32, #tpu.memory_space<vmem>>, vector<32x10xf32>
    %cst_43 = arith.constant dense<0.000000e+00> : vector<18x10xf32>
    %90 = tpu.matmul %88, %89, %cst_43 {dimension_numbers = #tpu.dot_dimension_numbers<[1], [0], [0], [1], [0, 0, 1, 1], [], []>} : vector<18x32xf32>, vector<32x10xf32>, vector<18x10xf32> -> vector<18x10xf32>
    %c0_44 = arith.constant 0 : index
    %c0_45 = arith.constant 0 : index
    %91 = vector.load %arg15[%c0_44, %c0_45] : memref<1x10xf32, #tpu.memory_space<vmem>>, vector<1x10xf32>
    %92 = vector.broadcast %91 : vector<1x10xf32> to vector<18x10xf32>
    %93 = arith.addf %90, %92 : vector<18x10xf32>
    %94 = arith.addf %78, %93 : vector<18x10xf32>
    %c0_46 = arith.constant 0 : index
    %c0_47 = arith.constant 0 : index
    %95 = vector.load %arg16[%c0_46, %c0_47] : memref<1x10xf32, #tpu.memory_space<vmem>>, vector<1x10xf32>
    %c0_48 = arith.constant 0 : index
    %c0_49 = arith.constant 0 : index
    %96 = vector.load %arg17[%c0_48, %c0_49] : memref<1x10xf32, #tpu.memory_space<vmem>>, vector<1x10xf32>
    %cst_50 = arith.constant dense<0.000000e+00> : vector<18xf32>
    %97 = vector.multi_reduction <add>, %94, %cst_50 [1] : vector<18x10xf32> to vector<18xf32>
    %98 = vector.shape_cast %97 : vector<18xf32> to vector<18x1xf32>
    %cst_51 = arith.constant 1.000000e+01 : f32
    %99 = vector.broadcast %cst_51 : f32 to vector<18x1xf32>
    %100 = arith.divf %98, %99 : vector<18x1xf32>
    %101 = vector.broadcast %100 : vector<18x1xf32> to vector<18x10xf32>
    %102 = arith.subf %94, %101 : vector<18x10xf32>
    %103 = arith.mulf %102, %102 : vector<18x10xf32>
    %cst_52 = arith.constant dense<0.000000e+00> : vector<18xf32>
    %104 = vector.multi_reduction <add>, %103, %cst_52 [1] : vector<18x10xf32> to vector<18xf32>
    %105 = vector.shape_cast %104 : vector<18xf32> to vector<18x1xf32>
    %cst_53 = arith.constant 1.000000e+01 : f32
    %106 = vector.broadcast %cst_53 : f32 to vector<18x1xf32>
    %107 = arith.divf %105, %106 : vector<18x1xf32>
    %108 = vector.broadcast %100 : vector<18x1xf32> to vector<18x10xf32>
    %109 = arith.subf %94, %108 : vector<18x10xf32>
    %cst_54 = arith.constant 9.99999974E-6 : f32
    %110 = vector.broadcast %cst_54 : f32 to vector<18x1xf32>
    %111 = arith.addf %107, %110 : vector<18x1xf32>
    %112 = math.rsqrt %111 : vector<18x1xf32>
    %113 = vector.broadcast %112 : vector<18x1xf32> to vector<18x10xf32>
    %114 = arith.mulf %109, %113 : vector<18x10xf32>
    %115 = vector.broadcast %95 : vector<1x10xf32> to vector<18x10xf32>
    %116 = arith.mulf %114, %115 : vector<18x10xf32>
    %117 = vector.broadcast %96 : vector<1x10xf32> to vector<18x10xf32>
    %118 = arith.addf %116, %117 : vector<18x10xf32>
    %c0_55 = arith.constant 0 : index
    %c0_56 = arith.constant 0 : index
    %119 = vector.load %arg18[%c0_55, %c0_56] : memref<10x30xf32, #tpu.memory_space<vmem>>, vector<10x30xf32>
    %cst_57 = arith.constant dense<0.000000e+00> : vector<18x30xf32>
    %120 = tpu.matmul %118, %119, %cst_57 {dimension_numbers = #tpu.dot_dimension_numbers<[1], [0], [0], [1], [0, 0, 1, 1], [], []>} : vector<18x10xf32>, vector<10x30xf32>, vector<18x30xf32> -> vector<18x30xf32>
    %c0_58 = arith.constant 0 : index
    %c0_59 = arith.constant 0 : index
    %121 = vector.load %arg19[%c0_58, %c0_59] : memref<1x30xf32, #tpu.memory_space<vmem>>, vector<1x30xf32>
    %122 = vector.broadcast %121 : vector<1x30xf32> to vector<18x30xf32>
    %123 = arith.addf %120, %122 : vector<18x30xf32>
    %124 = vector.extract_strided_slice %123 {offsets = [0, 0], sizes = [18, 10], strides = [1, 1]} : vector<18x30xf32> to vector<18x10xf32>
    %125 = vector.extract_strided_slice %123 {offsets = [0, 10], sizes = [18, 10], strides = [1, 1]} : vector<18x30xf32> to vector<18x10xf32>
    %126 = vector.extract_strided_slice %123 {offsets = [0, 20], sizes = [18, 10], strides = [1, 1]} : vector<18x30xf32> to vector<18x10xf32>
    %cst_60 = arith.constant dense<0.000000e+00> : vector<18x18xf32>
    %127 = tpu.matmul %124, %125, %cst_60 {dimension_numbers = #tpu.dot_dimension_numbers<[1], [1], [0], [0], [0, 0, 1, 0], [], []>} : vector<18x10xf32>, vector<18x10xf32>, vector<18x18xf32> -> vector<18x18xf32>
    %cst_61 = arith.constant 0.316227764 : f32
    %128 = vector.broadcast %cst_61 : f32 to vector<18x18xf32>
    %129 = arith.mulf %127, %128 : vector<18x18xf32>
    %130 = arith.addf %129, %25 : vector<18x18xf32>
    %cst_62 = arith.constant dense<0xFF800000> : vector<18xf32>
    %131 = vector.multi_reduction <maximumf>, %130, %cst_62 [1] : vector<18x18xf32> to vector<18xf32>
    %132 = vector.shape_cast %131 : vector<18xf32> to vector<18x1xf32>
    %133 = vector.broadcast %132 : vector<18x1xf32> to vector<18x18xf32>
    %134 = arith.subf %130, %133 : vector<18x18xf32>
    %135 = math.exp %134 : vector<18x18xf32>
    %cst_63 = arith.constant dense<0.000000e+00> : vector<18xf32>
    %136 = vector.multi_reduction <add>, %135, %cst_63 [1] : vector<18x18xf32> to vector<18xf32>
    %137 = vector.shape_cast %136 : vector<18xf32> to vector<18x1xf32>
    %138 = tpu.reciprocal %137 {approx = true} : vector<18x1xf32> -> vector<18x1xf32>
    %139 = vector.broadcast %138 : vector<18x1xf32> to vector<18x18xf32>
    %140 = arith.mulf %135, %139 : vector<18x18xf32>
    %cst_64 = arith.constant dense<0.000000e+00> : vector<18x10xf32>
    %141 = tpu.matmul %140, %126, %cst_64 {dimension_numbers = #tpu.dot_dimension_numbers<[1], [0], [0], [1], [0, 0, 1, 1], [], []>} : vector<18x18xf32>, vector<18x10xf32>, vector<18x10xf32> -> vector<18x10xf32>
    %c0_65 = arith.constant 0 : index
    %c0_66 = arith.constant 0 : index
    %142 = vector.load %arg20[%c0_65, %c0_66] : memref<10x10xf32, #tpu.memory_space<vmem>>, vector<10x10xf32>
    %cst_67 = arith.constant dense<0.000000e+00> : vector<18x10xf32>
    %143 = tpu.matmul %141, %142, %cst_67 {dimension_numbers = #tpu.dot_dimension_numbers<[1], [0], [0], [1], [0, 0, 1, 1], [], []>} : vector<18x10xf32>, vector<10x10xf32>, vector<18x10xf32> -> vector<18x10xf32>
    %c0_68 = arith.constant 0 : index
    %c0_69 = arith.constant 0 : index
    %144 = vector.load %arg21[%c0_68, %c0_69] : memref<1x10xf32, #tpu.memory_space<vmem>>, vector<1x10xf32>
    %145 = vector.broadcast %144 : vector<1x10xf32> to vector<18x10xf32>
    %146 = arith.addf %143, %145 : vector<18x10xf32>
    %147 = arith.addf %118, %146 : vector<18x10xf32>
    %c0_70 = arith.constant 0 : index
    %c0_71 = arith.constant 0 : index
    %148 = vector.load %arg22[%c0_70, %c0_71] : memref<1x10xf32, #tpu.memory_space<vmem>>, vector<1x10xf32>
    %c0_72 = arith.constant 0 : index
    %c0_73 = arith.constant 0 : index
    %149 = vector.load %arg23[%c0_72, %c0_73] : memref<1x10xf32, #tpu.memory_space<vmem>>, vector<1x10xf32>
    %cst_74 = arith.constant dense<0.000000e+00> : vector<18xf32>
    %150 = vector.multi_reduction <add>, %147, %cst_74 [1] : vector<18x10xf32> to vector<18xf32>
    %151 = vector.shape_cast %150 : vector<18xf32> to vector<18x1xf32>
    %cst_75 = arith.constant 1.000000e+01 : f32
    %152 = vector.broadcast %cst_75 : f32 to vector<18x1xf32>
    %153 = arith.divf %151, %152 : vector<18x1xf32>
    %154 = vector.broadcast %153 : vector<18x1xf32> to vector<18x10xf32>
    %155 = arith.subf %147, %154 : vector<18x10xf32>
    %156 = arith.mulf %155, %155 : vector<18x10xf32>
    %cst_76 = arith.constant dense<0.000000e+00> : vector<18xf32>
    %157 = vector.multi_reduction <add>, %156, %cst_76 [1] : vector<18x10xf32> to vector<18xf32>
    %158 = vector.shape_cast %157 : vector<18xf32> to vector<18x1xf32>
    %cst_77 = arith.constant 1.000000e+01 : f32
    %159 = vector.broadcast %cst_77 : f32 to vector<18x1xf32>
    %160 = arith.divf %158, %159 : vector<18x1xf32>
    %161 = vector.broadcast %153 : vector<18x1xf32> to vector<18x10xf32>
    %162 = arith.subf %147, %161 : vector<18x10xf32>
    %cst_78 = arith.constant 9.99999974E-6 : f32
    %163 = vector.broadcast %cst_78 : f32 to vector<18x1xf32>
    %164 = arith.addf %160, %163 : vector<18x1xf32>
    %165 = math.rsqrt %164 : vector<18x1xf32>
    %166 = vector.broadcast %165 : vector<18x1xf32> to vector<18x10xf32>
    %167 = arith.mulf %162, %166 : vector<18x10xf32>
    %168 = vector.broadcast %148 : vector<1x10xf32> to vector<18x10xf32>
    %169 = arith.mulf %167, %168 : vector<18x10xf32>
    %170 = vector.broadcast %149 : vector<1x10xf32> to vector<18x10xf32>
    %171 = arith.addf %169, %170 : vector<18x10xf32>
    %c0_79 = arith.constant 0 : index
    %c0_80 = arith.constant 0 : index
    %172 = vector.load %arg24[%c0_79, %c0_80] : memref<10x32xf32, #tpu.memory_space<vmem>>, vector<10x32xf32>
    %cst_81 = arith.constant dense<0.000000e+00> : vector<18x32xf32>
    %173 = tpu.matmul %171, %172, %cst_81 {dimension_numbers = #tpu.dot_dimension_numbers<[1], [0], [0], [1], [0, 0, 1, 1], [], []>} : vector<18x10xf32>, vector<10x32xf32>, vector<18x32xf32> -> vector<18x32xf32>
    %c0_82 = arith.constant 0 : index
    %c0_83 = arith.constant 0 : index
    %174 = vector.load %arg25[%c0_82, %c0_83] : memref<1x32xf32, #tpu.memory_space<vmem>>, vector<1x32xf32>
    %175 = vector.broadcast %174 : vector<1x32xf32> to vector<18x32xf32>
    %176 = arith.addf %173, %175 : vector<18x32xf32>
    %cst_84 = arith.constant 0.000000e+00 : f32
    %177 = vector.broadcast %cst_84 : f32 to vector<18x32xf32>
    %178 = arith.cmpf oge, %176, %177 : vector<18x32xf32>
    %cst_85 = arith.constant 2.000000e-01 : f32
    %179 = vector.broadcast %cst_85 : f32 to vector<18x32xf32>
    %180 = arith.mulf %179, %176 : vector<18x32xf32>
    %181 = arith.select %178, %176, %180 : vector<18x32xi1>, vector<18x32xf32>
    %c0_86 = arith.constant 0 : index
    %c0_87 = arith.constant 0 : index
    %182 = vector.load %arg26[%c0_86, %c0_87] : memref<32x10xf32, #tpu.memory_space<vmem>>, vector<32x10xf32>
    %cst_88 = arith.constant dense<0.000000e+00> : vector<18x10xf32>
    %183 = tpu.matmul %181, %182, %cst_88 {dimension_numbers = #tpu.dot_dimension_numbers<[1], [0], [0], [1], [0, 0, 1, 1], [], []>} : vector<18x32xf32>, vector<32x10xf32>, vector<18x10xf32> -> vector<18x10xf32>
    %c0_89 = arith.constant 0 : index
    %c0_90 = arith.constant 0 : index
    %184 = vector.load %arg27[%c0_89, %c0_90] : memref<1x10xf32, #tpu.memory_space<vmem>>, vector<1x10xf32>
    %185 = vector.broadcast %184 : vector<1x10xf32> to vector<18x10xf32>
    %186 = arith.addf %183, %185 : vector<18x10xf32>
    %187 = arith.addf %171, %186 : vector<18x10xf32>
    %c0_91 = arith.constant 0 : index
    %c0_92 = arith.constant 0 : index
    %188 = vector.load %arg28[%c0_91, %c0_92] : memref<1x10xf32, #tpu.memory_space<vmem>>, vector<1x10xf32>
    %c0_93 = arith.constant 0 : index
    %c0_94 = arith.constant 0 : index
    %189 = vector.load %arg29[%c0_93, %c0_94] : memref<1x10xf32, #tpu.memory_space<vmem>>, vector<1x10xf32>
    %cst_95 = arith.constant dense<0.000000e+00> : vector<18xf32>
    %190 = vector.multi_reduction <add>, %187, %cst_95 [1] : vector<18x10xf32> to vector<18xf32>
    %191 = vector.shape_cast %190 : vector<18xf32> to vector<18x1xf32>
    %cst_96 = arith.constant 1.000000e+01 : f32
    %192 = vector.broadcast %cst_96 : f32 to vector<18x1xf32>
    %193 = arith.divf %191, %192 : vector<18x1xf32>
    %194 = vector.broadcast %193 : vector<18x1xf32> to vector<18x10xf32>
    %195 = arith.subf %187, %194 : vector<18x10xf32>
    %196 = arith.mulf %195, %195 : vector<18x10xf32>
    %cst_97 = arith.constant dense<0.000000e+00> : vector<18xf32>
    %197 = vector.multi_reduction <add>, %196, %cst_97 [1] : vector<18x10xf32> to vector<18xf32>
    %198 = vector.shape_cast %197 : vector<18xf32> to vector<18x1xf32>
    %cst_98 = arith.constant 1.000000e+01 : f32
    %199 = vector.broadcast %cst_98 : f32 to vector<18x1xf32>
    %200 = arith.divf %198, %199 : vector<18x1xf32>
    %201 = vector.broadcast %193 : vector<18x1xf32> to vector<18x10xf32>
    %202 = arith.subf %187, %201 : vector<18x10xf32>
    %cst_99 = arith.constant 9.99999974E-6 : f32
    %203 = vector.broadcast %cst_99 : f32 to vector<18x1xf32>
    %204 = arith.addf %200, %203 : vector<18x1xf32>
    %205 = math.rsqrt %204 : vector<18x1xf32>
    %206 = vector.broadcast %205 : vector<18x1xf32> to vector<18x10xf32>
    %207 = arith.mulf %202, %206 : vector<18x10xf32>
    %208 = vector.broadcast %188 : vector<1x10xf32> to vector<18x10xf32>
    %209 = arith.mulf %207, %208 : vector<18x10xf32>
    %210 = vector.broadcast %189 : vector<1x10xf32> to vector<18x10xf32>
    %211 = arith.addf %209, %210 : vector<18x10xf32>
    %c0_100 = arith.constant 0 : index
    %c0_101 = arith.constant 0 : index
    %212 = vector.load %arg3[%c0_100, %c0_101] : memref<2x18xf32, #tpu.memory_space<vmem>>, vector<2x18xf32>
    %cst_102 = arith.constant dense<0.000000e+00> : vector<2x10xf32>
    %213 = tpu.matmul %212, %211, %cst_102 {dimension_numbers = #tpu.dot_dimension_numbers<[1], [0], [0], [1], [0, 0, 1, 1], [], []>} : vector<2x18xf32>, vector<18x10xf32>, vector<2x10xf32> -> vector<2x10xf32>
    %c0_103 = arith.constant 0 : index
    %c0_104 = arith.constant 0 : index
    %214 = vector.load %arg30[%c0_103, %c0_104] : memref<10x64xf32, #tpu.memory_space<vmem>>, vector<10x64xf32>
    %cst_105 = arith.constant dense<0.000000e+00> : vector<2x64xf32>
    %215 = tpu.matmul %213, %214, %cst_105 {dimension_numbers = #tpu.dot_dimension_numbers<[1], [0], [0], [1], [0, 0, 1, 1], [], []>} : vector<2x10xf32>, vector<10x64xf32>, vector<2x64xf32> -> vector<2x64xf32>
    %c0_106 = arith.constant 0 : index
    %c0_107 = arith.constant 0 : index
    %216 = vector.load %arg31[%c0_106, %c0_107] : memref<1x64xf32, #tpu.memory_space<vmem>>, vector<1x64xf32>
    %217 = vector.broadcast %216 : vector<1x64xf32> to vector<2x64xf32>
    %218 = arith.addf %215, %217 : vector<2x64xf32>
    %cst_108 = arith.constant 0.000000e+00 : f32
    %219 = vector.broadcast %cst_108 : f32 to vector<2x64xf32>
    %220 = arith.cmpf oge, %218, %219 : vector<2x64xf32>
    %cst_109 = arith.constant 2.000000e-01 : f32
    %221 = vector.broadcast %cst_109 : f32 to vector<2x64xf32>
    %222 = arith.mulf %221, %218 : vector<2x64xf32>
    %223 = arith.select %220, %218, %222 : vector<2x64xi1>, vector<2x64xf32>
    %c0_110 = arith.constant 0 : index
    %c0_111 = arith.constant 0 : index
    %224 = vector.load %arg32[%c0_110, %c0_111] : memref<64x32xf32, #tpu.memory_space<vmem>>, vector<64x32xf32>
    %cst_112 = arith.constant dense<0.000000e+00> : vector<2x32xf32>
    %225 = tpu.matmul %223, %224, %cst_112 {dimension_numbers = #tpu.dot_dimension_numbers<[1], [0], [0], [1], [0, 0, 1, 1], [], []>} : vector<2x64xf32>, vector<64x32xf32>, vector<2x32xf32> -> vector<2x32xf32>
    %c0_113 = arith.constant 0 : index
    %c0_114 = arith.constant 0 : index
    %226 = vector.load %arg33[%c0_113, %c0_114] : memref<1x32xf32, #tpu.memory_space<vmem>>, vector<1x32xf32>
    %227 = vector.broadcast %226 : vector<1x32xf32> to vector<2x32xf32>
    %228 = arith.addf %225, %227 : vector<2x32xf32>
    %cst_115 = arith.constant 0.000000e+00 : f32
    %229 = vector.broadcast %cst_115 : f32 to vector<2x32xf32>
    %230 = arith.cmpf oge, %228, %229 : vector<2x32xf32>
    %cst_116 = arith.constant 2.000000e-01 : f32
    %231 = vector.broadcast %cst_116 : f32 to vector<2x32xf32>
    %232 = arith.mulf %231, %228 : vector<2x32xf32>
    %233 = arith.select %230, %228, %232 : vector<2x32xi1>, vector<2x32xf32>
    %c0_117 = arith.constant 0 : index
    %c0_118 = arith.constant 0 : index
    %234 = vector.load %arg34[%c0_117, %c0_118] : memref<32x1xf32, #tpu.memory_space<vmem>>, vector<32x1xf32>
    %cst_119 = arith.constant dense<0.000000e+00> : vector<2x1xf32>
    %235 = tpu.matmul %233, %234, %cst_119 {dimension_numbers = #tpu.dot_dimension_numbers<[1], [0], [0], [1], [0, 0, 1, 1], [], []>} : vector<2x32xf32>, vector<32x1xf32>, vector<2x1xf32> -> vector<2x1xf32>
    %c0_120 = arith.constant 0 : index
    %c0_121 = arith.constant 0 : index
    %236 = vector.load %arg35[%c0_120, %c0_121] : memref<1x1xf32, #tpu.memory_space<vmem>>, vector<1x1xf32>
    %237 = vector.broadcast %236 : vector<1x1xf32> to vector<2x1xf32>
    %238 = arith.addf %235, %237 : vector<2x1xf32>
    %c0_122 = arith.constant 0 : index
    %c0_123 = arith.constant 0 : index
    %239 = vector.load %arg36[%c0_122, %c0_123] : memref<2x1xf32, #tpu.memory_space<vmem>>, vector<2x1xf32>
    tpu.vector_store %arg36[%c0_122, %c0_123], %238 {strides = array<i32>} : memref<2x1xf32, #tpu.memory_space<vmem>>, vector<2x1xf32>,
    return
  }
}

</mosaic_0001>

<llo_original>
// kernel: eq.26
$region0: #{eq.26}
  %s0 = inlined_call_operand.vmem [shape: s32[2,9], index: 0, kind: input, shape index: {}]
  %s1 = inlined_call_operand.vmem [shape: s32[18], index: 1, kind: output, shape index: {}]
  $region1: #{eq.26} parent=0
    #allocation0 [shape = 'u8[4096]{0}', space=vmem, size = 0x1000, scoped, tag = 'scoped mem for output reshape']
    #allocation1 [shape = 'u8[4096]{0}', space=vmem, size = 0x1000, scoped, tag = 'scoped mem for input reshape']
    %s3 = sshllo.u32 0, 2
    %v4 = vld [vmem:[%s0] sm:%s3]
    %5 = vst [vmem:[#allocation1] sm:%s3] %v4
    %v6 = vld [vmem:[#allocation1] sm:$0x1]
    %vm7 = vcmask 72704
    %8 = vst.msk [vmem:[#allocation0] sm:$0x1] %vm7, %v6
    %s9 = scalar_lea.vmem [#allocation1], 1
    %v10 = vld [vmem:[%s9] sm:$0x1]
    %11 = vrot.lane.b32.xlu0 %v10, 9
    %v12 = vpop.permute.xlu0 %11
    %vm13 = vcmask 146504
    %14 = vst.msk [vmem:[#allocation0] sm:$0x1] %vm13, %v12
    %s16 = sshllo.u32 0, 1
    %v18 = vld [vmem:[#allocation0] sm:%s16]
    %s19 = sshllo.u32 0, 1
    %20 = vst [vmem:[%s1] sm:%s19] %v18

// kernel: disc_forward.1
$region0: #{disc_forward.1}
  #allocation0 [shape = 'u32[]', space=smem, size = 0x4, offset = 0x4, fixed_abs, tag = 'smem constant byte address 0x4 - core index']
  #allocation1 [shape = 'u32[144,128]{1,0:T(1,128)}', space=vmem, size = 0x12000, scoped, tag = 'internal scratch']
  #allocation2 [shape = 'f32[1,1]{1,0:T(1,128)S(1)}', space=vmem, size = 0x200, scoped, tag = 'scoped memory for disc_forward.1']
  %s0 = inlined_call_operand.smem [shape: u32[37], index: -1, kind: input, shape index: {}]
  %s1 = sld [smem:[%s0]]
  %s2 = scalar_lea.smem %s0, 1
  %s3 = sld [smem:[%s2]]
  %s4 = scalar_lea.smem %s0, 2
  %s5 = sld [smem:[%s4]]
  %s6 = scalar_lea.smem %s0, 3
  %s7 = sld [smem:[%s6]]
  %s8 = scalar_lea.smem %s0, 4
  %s9 = sld [smem:[%s8]]
  %s10 = scalar_lea.smem %s0, 5
  %s11 = sld [smem:[%s10]]
  %s12 = scalar_lea.smem %s0, 6
  %s13 = sld [smem:[%s12]]
  %s14 = scalar_lea.smem %s0, 7
  %s15 = sld [smem:[%s14]]
  %s16 = scalar_lea.smem %s0, 8
  %s17 = sld [smem:[%s16]]
  %s18 = scalar_lea.smem %s0, 9
  %s19 = sld [smem:[%s18]]
  %s20 = scalar_lea.smem %s0, 10
  %s21 = sld [smem:[%s20]]
  %s22 = scalar_lea.smem %s0, 11
  %s23 = sld [smem:[%s22]]
  %s24 = scalar_lea.smem %s0, 12
  %s25 = sld [smem:[%s24]]
  %s26 = scalar_lea.smem %s0, 13
  %s27 = sld [smem:[%s26]]
  %s28 = scalar_lea.smem %s0, 14
  %s29 = sld [smem:[%s28]]
  %s30 = scalar_lea.smem %s0, 15
  %s31 = sld [smem:[%s30]]
  %s32 = scalar_lea.smem %s0, 16
  %s33 = sld [smem:[%s32]]
  %s34 = scalar_lea.smem %s0, 17
  %s35 = sld [smem:[%s34]]
  %s36 = scalar_lea.smem %s0, 18
  %s37 = sld [smem:[%s36]]
  %s38 = scalar_lea.smem %s0, 19
  %s39 = sld [smem:[%s38]]
  %s40 = scalar_lea.smem %s0, 20
  %s41 = sld [smem:[%s40]]
  %s42 = scalar_lea.smem %s0, 21
  %s43 = sld [smem:[%s42]]
  %s44 = scalar_lea.smem %s0, 22
  %s45 = sld [smem:[%s44]]
  %s46 = scalar_lea.smem %s0, 23
  %s47 = sld [smem:[%s46]]
  %s48 = scalar_lea.smem %s0, 24
  %s49 = sld [smem:[%s48]]
  %s50 = scalar_lea.smem %s0, 25
  %s51 = sld [smem:[%s50]]
  %s52 = scalar_lea.smem %s0, 26
  %s53 = sld [smem:[%s52]]
  %s54 = scalar_lea.smem %s0, 27
  %s55 = sld [smem:[%s54]]
  %s56 = scalar_lea.smem %s0, 28
  %s57 = sld [smem:[%s56]]
  %s58 = scalar_lea.smem %s0, 29
  %s59 = sld [smem:[%s58]]
  %s60 = scalar_lea.smem %s0, 30
  %s61 = sld [smem:[%s60]]
  %s62 = scalar_lea.smem %s0, 31
  %s63 = sld [smem:[%s62]]
  %s64 = scalar_lea.smem %s0, 32
  %s65 = sld [smem:[%s64]]
  %s66 = scalar_lea.smem %s0, 33
  %s67 = sld [smem:[%s66]]
  %s68 = scalar_lea.smem %s0, 34
  %s69 = sld [smem:[%s68]]
  %s70 = scalar_lea.smem %s0, 35
  %s71 = sld [smem:[%s70]]
  %s72 = scalar_lea.smem %s0, 36
  %s73 = sld [smem:[%s72]]
  %s74 = sld [smem:[#allocation0]]
  $region154: #{disc_forward.1} parent=0
    _
  %s76 = ssub.s32 1, %s74
  %s77 = scalar_select 0, %s76, %s74
  %v78 = vstv %s71
  %79 = vst [vmem:[#allocation2] sm:$0x1] %v78
  // Predicated region
  $region2: #{disc_forward.1} parent=0 // pred_check
    _
  $region3: #{disc_forward.1} parent=0 // pred_check_branch
    %81 = sbr.rel (0) target = $region5
  $region4: #{disc_forward.1} parent=0 // pred_region
    _
  $region5: #{disc_forward.1} parent=0 // pred_fallthru
    _
  // Predicated region
  $region6: #{disc_forward.1} parent=0 // pred_check
    _
  $region7: #{disc_forward.1} parent=0 // pred_check_branch
    %83 = sbr.rel (0) target = $region9
  $region8: #{disc_forward.1} parent=0 // pred_region
    _
  $region9: #{disc_forward.1} parent=0 // pred_fallthru
    _
  // Predicated region
  $region10: #{disc_forward.1} parent=0 // pred_check
    _
  $region11: #{disc_forward.1} parent=0 // pred_check_branch
    %85 = sbr.rel (0) target = $region13
  $region12: #{disc_forward.1} parent=0 // pred_region
    _
  $region13: #{disc_forward.1} parent=0 // pred_fallthru
    _
  // Predicated region
  $region14: #{disc_forward.1} parent=0 // pred_check
    _
  $region15: #{disc_forward.1} parent=0 // pred_check_branch
    %87 = sbr.rel (0) target = $region17
  $region16: #{disc_forward.1} parent=0 // pred_region
    _
  $region17: #{disc_forward.1} parent=0 // pred_fallthru
    _
  // Predicated region
  $region18: #{disc_forward.1} parent=0 // pred_check
    _
  $region19: #{disc_forward.1} parent=0 // pred_check_branch
    %89 = sbr.rel (0) target = $region21
  $region20: #{disc_forward.1} parent=0 // pred_region
    _
  $region21: #{disc_forward.1} parent=0 // pred_fallthru
    _
  // Predicated region
  $region22: #{disc_forward.1} parent=0 // pred_check
    _
  $region23: #{disc_forward.1} parent=0 // pred_check_branch
    %91 = sbr.rel (0) target = $region25
  $region24: #{disc_forward.1} parent=0 // pred_region
    _
  $region25: #{disc_forward.1} parent=0 // pred_fallthru
    _
  // Predicated region
  $region26: #{disc_forward.1} parent=0 // pred_check
    _
  $region27: #{disc_forward.1} parent=0 // pred_check_branch
    %93 = sbr.rel (0) target = $region29
  $region28: #{disc_forward.1} parent=0 // pred_region
    _
  $region29: #{disc_forward.1} parent=0 // pred_fallthru
    _
  // Predicated region
  $region30: #{disc_forward.1} parent=0 // pred_check
    _
  $region31: #{disc_forward.1} parent=0 // pred_check_branch
    %95 = sbr.rel (0) target = $region33
  $region32: #{disc_forward.1} parent=0 // pred_region
    _
  $region33: #{disc_forward.1} parent=0 // pred_fallthru
    _
  // Predicated region
  $region34: #{disc_forward.1} parent=0 // pred_check
    _
  $region35: #{disc_forward.1} parent=0 // pred_check_branch
    %97 = sbr.rel (0) target = $region37
  $region36: #{disc_forward.1} parent=0 // pred_region
    _
  $region37: #{disc_forward.1} parent=0 // pred_fallthru
    _
  // Predicated region
  $region38: #{disc_forward.1} parent=0 // pred_check
    _
  $region39: #{disc_forward.1} parent=0 // pred_check_branch
    %99 = sbr.rel (0) target = $region41
  $region40: #{disc_forward.1} parent=0 // pred_region
    _
  $region41: #{disc_forward.1} parent=0 // pred_fallthru
    _
  // Predicated region
  $region42: #{disc_forward.1} parent=0 // pred_check
    _
  $region43: #{disc_forward.1} parent=0 // pred_check_branch
    %101 = sbr.rel (0) target = $region45
  $region44: #{disc_forward.1} parent=0 // pred_region
    _
  $region45: #{disc_forward.1} parent=0 // pred_fallthru
    _
  // Predicated region
  $region46: #{disc_forward.1} parent=0 // pred_check
    _
  $region47: #{disc_forward.1} parent=0 // pred_check_branch
    %103 = sbr.rel (0) target = $region49
  $region48: #{disc_forward.1} parent=0 // pred_region
    _
  $region49: #{disc_forward.1} parent=0 // pred_fallthru
    _
  // Predicated region
  $region50: #{disc_forward.1} parent=0 // pred_check
    _
  $region51: #{disc_forward.1} parent=0 // pred_check_branch
    %105 = sbr.rel (0) target = $region53
  $region52: #{disc_forward.1} parent=0 // pred_region
    _
  $region53: #{disc_forward.1} parent=0 // pred_fallthru
    _
  // Predicated region
  $region54: #{disc_forward.1} parent=0 // pred_check
    _
  $region55: #{disc_forward.1} parent=0 // pred_check_branch
    %107 = sbr.rel (0) target = $region57
  $region56: #{disc_forward.1} parent=0 // pred_region
    _
  $region57: #{disc_forward.1} parent=0 // pred_fallthru
    _
  // Predicated region
  $region58: #{disc_forward.1} parent=0 // pred_check
    _
  $region59: #{disc_forward.1} parent=0 // pred_check_branch
    %109 = sbr.rel (0) target = $region61
  $region60: #{disc_forward.1} parent=0 // pred_region
    _
  $region61: #{disc_forward.1} parent=0 // pred_fallthru
    _
  // Predicated region
  $region62: #{disc_forward.1} parent=0 // pred_check
    _
  $region63: #{disc_forward.1} parent=0 // pred_check_branch
    %111 = sbr.rel (0) target = $region65
  $region64: #{disc_forward.1} parent=0 // pred_region
    _
  $region65: #{disc_forward.1} parent=0 // pred_fallthru
    _
  // Predicated region
  $region66: #{disc_forward.1} parent=0 // pred_check
    _
  $region67: #{disc_forward.1} parent=0 // pred_check_branch
    %113 = sbr.rel (0) target = $region69
  $region68: #{disc_forward.1} parent=0 // pred_region
    _
  $region69: #{disc_forward.1} parent=0 // pred_fallthru
    _
  // Predicated region
  $region70: #{disc_forward.1} parent=0 // pred_check
    _
  $region71: #{disc_forward.1} parent=0 // pred_check_branch
    %115 = sbr.rel (0) target = $region73
  $region72: #{disc_forward.1} parent=0 // pred_region
    _
  $region73: #{disc_forward.1} parent=0 // pred_fallthru
    _
  // Predicated region
  $region74: #{disc_forward.1} parent=0 // pred_check
    _
  $region75: #{disc_forward.1} parent=0 // pred_check_branch
    %117 = sbr.rel (0) target = $region77
  $region76: #{disc_forward.1} parent=0 // pred_region
    _
  $region77: #{disc_forward.1} parent=0 // pred_fallthru
    _
  // Predicated region
  $region78: #{disc_forward.1} parent=0 // pred_check
    _
  $region79: #{disc_forward.1} parent=0 // pred_check_branch
    %119 = sbr.rel (0) target = $region81
  $region80: #{disc_forward.1} parent=0 // pred_region
    _
  $region81: #{disc_forward.1} parent=0 // pred_fallthru
    _
  // Predicated region
  $region82: #{disc_forward.1} parent=0 // pred_check
    _
  $region83: #{disc_forward.1} parent=0 // pred_check_branch
    %121 = sbr.rel (0) target = $region85
  $region84: #{disc_forward.1} parent=0 // pred_region
    _
  $region85: #{disc_forward.1} parent=0 // pred_fallthru
    _
  // Predicated region
  $region86: #{disc_forward.1} parent=0 // pred_check
    _
  $region87: #{disc_forward.1} parent=0 // pred_check_branch
    %123 = sbr.rel (0) target = $region89
  $region88: #{disc_forward.1} parent=0 // pred_region
    _
  $region89: #{disc_forward.1} parent=0 // pred_fallthru
    _
  // Predicated region
  $region90: #{disc_forward.1} parent=0 // pred_check
    _
  $region91: #{disc_forward.1} parent=0 // pred_check_branch
    %125 = sbr.rel (0) target = $region93
  $region92: #{disc_forward.1} parent=0 // pred_region
    _
  $region93: #{disc_forward.1} parent=0 // pred_fallthru
    _
  // Predicated region
  $region94: #{disc_forward.1} parent=0 // pred_check
    _
  $region95: #{disc_forward.1} parent=0 // pred_check_branch
    %127 = sbr.rel (0) target = $region97
  $region96: #{disc_forward.1} parent=0 // pred_region
    _
  $region97: #{disc_forward.1} parent=0 // pred_fallthru
    _
  // Predicated region
  $region98: #{disc_forward.1} parent=0 // pred_check
    _
  $region99: #{disc_forward.1} parent=0 // pred_check_branch
    %129 = sbr.rel (0) target = $region101
  $region100: #{disc_forward.1} parent=0 // pred_region
    _
  $region101: #{disc_forward.1} parent=0 // pred_fallthru
    _
  // Predicated region
  $region102: #{disc_forward.1} parent=0 // pred_check
    _
  $region103: #{disc_forward.1} parent=0 // pred_check_branch
    %131 = sbr.rel (0) target = $region105
  $region104: #{disc_forward.1} parent=0 // pred_region
    _
  $region105: #{disc_forward.1} parent=0 // pred_fallthru
    _
  // Predicated region
  $region106: #{disc_forward.1} parent=0 // pred_check
    _
  $region107: #{disc_forward.1} parent=0 // pred_check_branch
    %133 = sbr.rel (0) target = $region109
  $region108: #{disc_forward.1} parent=0 // pred_region
    _
  $region109: #{disc_forward.1} parent=0 // pred_fallthru
    _
  // Predicated region
  $region110: #{disc_forward.1} parent=0 // pred_check
    _
  $region111: #{disc_forward.1} parent=0 // pred_check_branch
    %135 = sbr.rel (0) target = $region113
  $region112: #{disc_forward.1} parent=0 // pred_region
    _
  $region113: #{disc_forward.1} parent=0 // pred_fallthru
    _
  // Predicated region
  $region114: #{disc_forward.1} parent=0 // pred_check
    _
  $region115: #{disc_forward.1} parent=0 // pred_check_branch
    %137 = sbr.rel (0) target = $region117
  $region116: #{disc_forward.1} parent=0 // pred_region
    _
  $region117: #{disc_forward.1} parent=0 // pred_fallthru
    _
  // Predicated region
  $region118: #{disc_forward.1} parent=0 // pred_check
    _
  $region119: #{disc_forward.1} parent=0 // pred_check_branch
    %139 = sbr.rel (0) target = $region121
  $region120: #{disc_forward.1} parent=0 // pred_region
    _
  $region121: #{disc_forward.1} parent=0 // pred_fallthru
    _
  // Predicated region
  $region122: #{disc_forward.1} parent=0 // pred_check
    _
  $region123: #{disc_forward.1} parent=0 // pred_check_branch
    %141 = sbr.rel (0) target = $region125
  $region124: #{disc_forward.1} parent=0 // pred_region
    _
  $region125: #{disc_forward.1} parent=0 // pred_fallthru
    _
  // Predicated region
  $region126: #{disc_forward.1} parent=0 // pred_check
    _
  $region127: #{disc_forward.1} parent=0 // pred_check_branch
    %143 = sbr.rel (0) target = $region129
  $region128: #{disc_forward.1} parent=0 // pred_region
    _
  $region129: #{disc_forward.1} parent=0 // pred_fallthru
    _
  // Predicated region
  $region130: #{disc_forward.1} parent=0 // pred_check
    _
  $region131: #{disc_forward.1} parent=0 // pred_check_branch
    %145 = sbr.rel (0) target = $region133
  $region132: #{disc_forward.1} parent=0 // pred_region
    _
  $region133: #{disc_forward.1} parent=0 // pred_fallthru
    _
  // Predicated region
  $region134: #{disc_forward.1} parent=0 // pred_check
    _
  $region135: #{disc_forward.1} parent=0 // pred_check_branch
    %147 = sbr.rel (0) target = $region137
  $region136: #{disc_forward.1} parent=0 // pred_region
    _
  $region137: #{disc_forward.1} parent=0 // pred_fallthru
    _
  // Predicated region
  $region138: #{disc_forward.1} parent=0 // pred_check
    _
  $region139: #{disc_forward.1} parent=0 // pred_check_branch
    %149 = sbr.rel (0) target = $region141
  $region140: #{disc_forward.1} parent=0 // pred_region
    _
  $region141: #{disc_forward.1} parent=0 // pred_fallthru
    _
  // Predicated region
  $region142: #{disc_forward.1} parent=0 // pred_check
    _
  $region143: #{disc_forward.1} parent=0 // pred_check_branch
    %151 = sbr.rel (0) target = $region145
  $region144: #{disc_forward.1} parent=0 // pred_region
    _
  $region145: #{disc_forward.1} parent=0 // pred_fallthru
    _
  %v152 = vld [vmem:[%s1] sm:$0xff]
  %v153 = vld [vmem:[%s1 + $0x8] sm:$0xff]
  %v154 = vld [vmem:[%s1 + $0x10] sm:$0x3]
  %v155 = vld [vmem:[%s11] sm:$0x1]
  %v157 = vlaneseq
  %v158 = vshrl.u32 %v157, 7
  %v159 = vsub.s32 0, %v158
  %v160 = vrot.slane %v155, %v159
  %v162 = vld [vmem:[%s9] sm:$0x1]
  %164 = vset.pattern.permute.xlu0 0
  %165 = vperm.xlu0 %164, %v152
  %v166 = vpop.permute.xlu0 %165
  %169 = vset.pattern.permute.xlu0 0
  %170 = vperm.xlu0 %169, %v153
  %v171 = vpop.permute.xlu0 %170
  %174 = vset.pattern.permute.xlu0 0
  %175 = vperm.xlu0 %174, %v154
  %v176 = vpop.permute.xlu0 %175
  %v178 = vlaneseq
  %v179 = vshrl.u32 %v178, 7
  %v180 = vsub.s32 0, %v179
  %v181 = vrot.slane %v162, %v180
  %v182 = vmul.f32 %v166, %v181
  %v183 = vmul.f32 %v171, %v181
  %v184 = vmul.f32 %v176, %v181
  %v185 = vadd.f32 %v160, %v182
  %v186 = vadd.f32 %v160, %v183
  %v187 = vadd.f32 %v160, %v184
  %v188 = vld [vmem:[%s9 + $0x1] sm:$0x1]
  %189 = vset.pattern.permute.xlu0 1
  %190 = vperm.xlu0 %189, %v152
  %v191 = vpop.permute.xlu0 %190
  %193 = vset.pattern.permute.xlu0 1
  %194 = vperm.xlu0 %193, %v153
  %v195 = vpop.permute.xlu0 %194
  %197 = vset.pattern.permute.xlu0 1
  %198 = vperm.xlu0 %197, %v154
  %v199 = vpop.permute.xlu0 %198
  %v201 = vlaneseq
  %v202 = vshrl.u32 %v201, 7
  %v203 = vsub.s32 0, %v202
  %v204 = vrot.slane %v188, %v203
  %v205 = vmul.f32 %v191, %v204
  %v206 = vmul.f32 %v195, %v204
  %v207 = vmul.f32 %v199, %v204
  %v208 = vadd.f32 %v185, %v205
  %v209 = vadd.f32 %v186, %v206
  %v210 = vadd.f32 %v187, %v207
  %v211 = vld [vmem:[%s9 + $0x2] sm:$0x1]
  %212 = vset.pattern.permute.xlu0 2
  %213 = vperm.xlu0 %212, %v152
  %v214 = vpop.permute.xlu0 %213
  %216 = vset.pattern.permute.xlu0 2
  %217 = vperm.xlu0 %216, %v153
  %v218 = vpop.permute.xlu0 %217
  %220 = vset.pattern.permute.xlu0 2
  %221 = vperm.xlu0 %220, %v154
  %v222 = vpop.permute.xlu0 %221
  %v224 = vlaneseq
  %v225 = vshrl.u32 %v224, 7
  %v226 = vsub.s32 0, %v225
  %v227 = vrot.slane %v211, %v226
  %v228 = vmul.f32 %v214, %v227
  %v229 = vmul.f32 %v218, %v227
  %v230 = vmul.f32 %v222, %v227
  %v231 = vadd.f32 %v208, %v228
  %v232 = vadd.f32 %v209, %v229
  %v233 = vadd.f32 %v210, %v230
  %v234 = vld [vmem:[%s3] sm:$0xff]
  %v235 = vld [vmem:[%s3 + $0x8] sm:$0xff]
  %v236 = vld [vmem:[%s3 + $0x10] sm:$0x3]
  %238 = vset.pattern.permute.xlu0 0
  %239 = vperm.xlu0 %238, %v234
  %v240 = vpop.permute.xlu0 %239
  %243 = vset.pattern.permute.xlu0 0
  %244 = vperm.xlu0 %243, %v235
  %v245 = vpop.permute.xlu0 %244
  %248 = vset.pattern.permute.xlu0 0
  %249 = vperm.xlu0 %248, %v236
  %v250 = vpop.permute.xlu0 %249
  %v252 = vmul.f32 %v231, %v240
  %v253 = vmul.f32 %v232, %v245
  %v254 = vmul.f32 %v233, %v250
  %v255 = vld [vmem:[%s5] sm:$0xff]
  %v256 = vld [vmem:[%s5 + $0x8] sm:$0xff]
  %v257 = vld [vmem:[%s5 + $0x10] sm:$0x3]
  %v258 = vld [vmem:[%s13] sm:$0xff]
  %v259 = vld [vmem:[%s13 + $0x8] sm:$0x3]
  %v260 = vld [vmem:[%s15] sm:$0x1]
  %v262 = vlaneseq
  %v263 = vshrl.u32 %v262, 7
  %v264 = vsub.s32 0, %v263
  %v265 = vrot.slane %v260, %v264
  %vm267 = vcmask 80896
  %v269 = vsel %vm267, %v252, 0
  %v272 = vsel %vm267, %v253, 0
  %v275 = vsel %vm267, %v254, 0
  %vm277 = vcmask 1041408
  %v279 = vsel %vm277, %v259, 0
  %281 = vmatprep.subr.mxu0 0.0
  %282 = vmatpush1.msra.mxu0 %v258
  %283 = vmatprep.subr.mxu0 0.0
  %284 = vmatpush1.msra.mxu0 %v279
  %285 = vmatprep.subr.mxu0 0.0
  %286 = vmatpush1.msra.mxu0 0.0
  %287 = vmatprep.subr.mxu0 0.0
  %288 = vmatpush1.msra.mxu0 0.0
  %289 = vmatprep.subr.mxu0 0.0
  %290 = vmatpush1.msra.mxu0 0.0
  %291 = vmatprep.subr.mxu0 0.0
  %292 = vmatpush1.msra.mxu0 0.0
  %293 = vmatprep.subr.mxu0 0.0
  %294 = vmatpush1.msra.mxu0 0.0
  %295 = vmatprep.subr.mxu0 0.0
  %296 = vmatpush1.msra.mxu0 0.0
  %297 = vmatprep.subr.mxu0 0.0
  %298 = vmatpush1.msra.mxu0 0.0
  %299 = vmatprep.subr.mxu0 0.0
  %300 = vmatpush1.msra.mxu0 0.0
  %301 = vmatprep.subr.mxu0 0.0
  %302 = vmatpush1.msra.mxu0 0.0
  %303 = vmatprep.subr.mxu0 0.0
  %304 = vmatpush1.msra.mxu0 0.0
  %305 = vmatprep.subr.mxu0 0.0
  %306 = vmatpush1.msra.mxu0 0.0
  %307 = vmatprep.subr.mxu0 0.0
  %308 = vmatpush1.msra.mxu0 0.0
  %309 = vmatprep.subr.mxu0 0.0
  %310 = vmatpush1.msra.mxu0 0.0
  %311 = vmatprep.subr.mxu0 0.0
  %312 = vmatpush1.msra.mxu0 0.0
  %313 = vmatprep.subr.mxu0 0.0
  %314 = vmatpush1.msra.mxu0 0.0
  %315 = vmatprep.subr.mxu0 0.0
  %316 = vmatpush1.msra.mxu0 0.0
  %317 = vmatprep.subr.mxu0 0.0
  %318 = vmatpush1.msra.mxu0 0.0
  %319 = vmatprep.subr.mxu0 0.0
  %320 = vmatpush1.msra.mxu0 0.0
  %321 = vmatprep.subr.mxu0 0.0
  %322 = vmatpush1.msra.mxu0 0.0
  %323 = vmatprep.subr.mxu0 0.0
  %324 = vmatpush1.msra.mxu0 0.0
  %325 = vmatprep.subr.mxu0 0.0
  %326 = vmatpush1.msra.mxu0 0.0
  %327 = vmatprep.subr.mxu0 0.0
  %328 = vmatpush1.msra.mxu0 0.0
  %329 = vmatprep.subr.mxu0 0.0
  %330 = vmatpush1.msra.mxu0 0.0
  %331 = vmatprep.subr.mxu0 0.0
  %332 = vmatpush1.msra.mxu0 0.0
  %333 = vmatprep.subr.mxu0 0.0
  %334 = vmatpush1.msra.mxu0 0.0
  %335 = vmatprep.subr.mxu0 0.0
  %336 = vmatpush1.msra.mxu0 0.0
  %337 = vmatprep.subr.mxu0 0.0
  %338 = vmatpush1.msra.mxu0 0.0
  %339 = vmatprep.subr.mxu0 0.0
  %340 = vmatpush1.msra.mxu0 0.0
  %341 = vmatprep.subr.mxu0 0.0
  %342 = vmatpush1.msra.mxu0 0.0
  %343 = vmatprep.subr.mxu0 0.0
  %344 = vmatpush1.msra.mxu0 0.0
  %345 = vmatprep.mubr.f32.mxu0 0.0
  %346 = vmatmul.mubr.f32.gmra.mrb[0].mxu0 %v269
  %v347 = vpop.f32.mrb[0].mxu0
  %v348 = vadd.f32 %v265, %v347
  %v349 = vpop.f32.mrb[0].mxu0
  %350 = vmatprep.mubr.f32.mxu0 0.0
  %351 = vmatmul.mubr.f32.gmra.mrb[0].mxu0 %v272
  %v352 = vpop.f32.mrb[0].mxu0
  %v353 = vadd.f32 %v265, %v352
  %v354 = vpop.f32.mrb[0].mxu0
  %355 = vmatprep.mubr.f32.mxu0 0.0
  %356 = vmatmul.mubr.f32.gmra.mrb[0].mxu0 %v275
  %v357 = vpop.f32.mrb[0].mxu0
  %v358 = vadd.f32 %v265, %v357
  %v359 = vpop.f32.mrb[0].mxu0
  %360 = vdwg.mxu0
  %364 = vrot.lane.b32.xlu0 %v348, 118
  %v365 = vpop.permute.xlu0 %364
  %366 = vrot.lane.b32.xlu0 %v353, 118
  %v367 = vpop.permute.xlu0 %366
  %368 = vrot.lane.b32.xlu0 %v358, 118
  %v369 = vpop.permute.xlu0 %368
  %v370 = vsel %vm267, %v348, 0
  %v372 = vsel %vm267, %v353, 0
  %v374 = vsel %vm267, %v358, 0
  %v376 = vsel %vm267, %v365, 0
  %v378 = vsel %vm267, %v367, 0
  %v380 = vsel %vm267, %v369, 0
  %382 = vmatprep.subr.mxu0 0.0
  %383 = vmatpush1.xpose.msra.mxu0 %v376
  %384 = vmatprep.subr.mxu0 0.0
  %385 = vmatpush1.xpose.msra.mxu0 %v378
  %386 = vmatprep.subr.mxu0 0.0
  %387 = vmatpush1.xpose.msra.mxu0 %v380
  %388 = vmatprep.subr.mxu0 0.0
  %389 = vmatpush1.xpose.msra.mxu0 0.0
  %390 = vmatprep.subr.mxu0 0.0
  %391 = vmatpush1.xpose.msra.mxu0 0.0
  %392 = vmatprep.subr.mxu0 0.0
  %393 = vmatpush1.xpose.msra.mxu0 0.0
  %394 = vmatprep.subr.mxu0 0.0
  %395 = vmatpush1.xpose.msra.mxu0 0.0
  %396 = vmatprep.subr.mxu0 0.0
  %397 = vmatpush1.xpose.msra.mxu0 0.0
  %398 = vmatprep.subr.mxu0 0.0
  %399 = vmatpush1.xpose.msra.mxu0 0.0
  %400 = vmatprep.subr.mxu0 0.0
  %401 = vmatpush1.xpose.msra.mxu0 0.0
  %402 = vmatprep.subr.mxu0 0.0
  %403 = vmatpush1.xpose.msra.mxu0 0.0
  %404 = vmatprep.subr.mxu0 0.0
  %405 = vmatpush1.xpose.msra.mxu0 0.0
  %406 = vmatprep.subr.mxu0 0.0
  %407 = vmatpush1.xpose.msra.mxu0 0.0
  %408 = vmatprep.subr.mxu0 0.0
  %409 = vmatpush1.xpose.msra.mxu0 0.0
  %410 = vmatprep.subr.mxu0 0.0
  %411 = vmatpush1.xpose.msra.mxu0 0.0
  %412 = vmatprep.subr.mxu0 0.0
  %413 = vmatpush1.xpose.msra.mxu0 0.0
  %414 = vmatprep.subr.mxu0 0.0
  %415 = vmatpush1.xpose.msra.mxu0 0.0
  %416 = vmatprep.subr.mxu0 0.0
  %417 = vmatpush1.xpose.msra.mxu0 0.0
  %418 = vmatprep.subr.mxu0 0.0
  %419 = vmatpush1.xpose.msra.mxu0 0.0
  %420 = vmatprep.subr.mxu0 0.0
  %421 = vmatpush1.xpose.msra.mxu0 0.0
  %422 = vmatprep.subr.mxu0 0.0
  %423 = vmatpush1.xpose.msra.mxu0 0.0
  %424 = vmatprep.subr.mxu0 0.0
  %425 = vmatpush1.xpose.msra.mxu0 0.0
  %426 = vmatprep.subr.mxu0 0.0
  %427 = vmatpush1.xpose.msra.mxu0 0.0
  %428 = vmatprep.subr.mxu0 0.0
  %429 = vmatpush1.xpose.msra.mxu0 0.0
  %430 = vmatprep.subr.mxu0 0.0
  %431 = vmatpush1.xpose.msra.mxu0 0.0
  %432 = vmatprep.subr.mxu0 0.0
  %433 = vmatpush1.xpose.msra.mxu0 0.0
  %434 = vmatprep.subr.mxu0 0.0
  %435 = vmatpush1.xpose.msra.mxu0 0.0
  %436 = vmatprep.subr.mxu0 0.0
  %437 = vmatpush1.xpose.msra.mxu0 0.0
  %438 = vmatprep.subr.mxu0 0.0
  %439 = vmatpush1.xpose.msra.mxu0 0.0
  %440 = vmatprep.subr.mxu0 0.0
  %441 = vmatpush1.xpose.msra.mxu0 0.0
  %442 = vmatprep.subr.mxu0 0.0
  %443 = vmatpush1.xpose.msra.mxu0 0.0
  %444 = vmatprep.subr.mxu0 0.0
  %445 = vmatpush1.xpose.msra.mxu0 0.0
  %446 = vmatprep.mubr.f32.mxu0 0.0
  %447 = vmatmul.mubr.f32.gmra.mrb[0].mxu0 %v370
  %v448 = vpop.f32.mrb[0].mxu0
  %v449 = vadd.f32 0.0, %v448
  %v450 = vpop.f32.mrb[0].mxu0
  %451 = vmatprep.mubr.f32.mxu0 0.0
  %452 = vmatmul.mubr.f32.gmra.mrb[0].mxu0 %v372
  %v453 = vpop.f32.mrb[0].mxu0
  %v454 = vadd.f32 0.0, %v453
  %v455 = vpop.f32.mrb[0].mxu0
  %456 = vmatprep.mubr.f32.mxu0 0.0
  %457 = vmatmul.mubr.f32.gmra.mrb[0].mxu0 %v374
  %v458 = vpop.f32.mrb[0].mxu0
  %v459 = vadd.f32 0.0, %v458
  %v460 = vpop.f32.mrb[0].mxu0
  %461 = vdwg.mxu0
  %v462 = vmul.f32 %v449, 0.31622776
  %v463 = vmul.f32 %v454, 0.31622776
  %v464 = vmul.f32 %v459, 0.31622776
  %v465 = vadd.f32 %v462, %v255
  %v466 = vadd.f32 %v463, %v256
  %v467 = vadd.f32 %v464, %v257
  %vm468 = vcmask 146432
  %v469 = vsel %vm468, %v465, -inf
  %470 = vmax.xlane.f32.xlu0 %v469
  %v471 = vpop.xlane.xlu0 %470
  %v472 = vsel %vm468, %v466, -inf
  %473 = vmax.xlane.f32.xlu0 %v472
  %v474 = vpop.xlane.xlu0 %473
  %vm475 = vcmask 140288
  %v476 = vsel %vm475, %v467, -inf
  %477 = vmax.xlane.f32.xlu0 %v476
  %v478 = vpop.xlane.xlu0 %477
  %v479 = vsub.f32 %v465, %v471
  %v480 = vsub.f32 %v466, %v474
  %v481 = vsub.f32 %v467, %v478
  %v482 = vmul.f32 %v479, 1.442695
  %v483 = vpow.pop %v482
  %v484 = vmul.f32 %v480, 1.442695
  %v485 = vpow.pop %v484
  %v486 = vmul.f32 %v481, 1.442695
  %v487 = vpow.pop %v486
  %v488 = vsel %vm468, %v483, 0.0
  %489 = vadd.xlane.f32.xlu0 %v488
  %v490 = vpop.xlane.xlu0 %489
  %v491 = vsel %vm468, %v485, 0.0
  %492 = vadd.xlane.f32.xlu0 %v491
  %v493 = vpop.xlane.xlu0 %492
  %v494 = vsel %vm475, %v487, 0.0
  %495 = vadd.xlane.f32.xlu0 %v494
  %v496 = vpop.xlane.xlu0 %495
  %v497 = vrcp.pop %v490
  %v498 = vrcp.pop %v493
  %v499 = vrcp.pop %v496
  %v500 = vmul.f32 %v483, %v497
  %v501 = vmul.f32 %v485, %v498
  %v502 = vmul.f32 %v487, %v499
  %503 = vrot.lane.b32.xlu0 %v348, 108
  %v504 = vpop.permute.xlu0 %503
  %505 = vrot.lane.b32.xlu0 %v353, 108
  %v506 = vpop.permute.xlu0 %505
  %507 = vrot.lane.b32.xlu0 %v358, 108
  %v508 = vpop.permute.xlu0 %507
  %v512 = vsel %vm468, %v500, 0
  %v515 = vsel %vm468, %v501, 0
  %v518 = vsel %vm468, %v502, 0
  %v520 = vsel %vm277, %v508, 0
  %522 = vmatprep.subr.mxu0 0.0
  %523 = vmatpush1.msra.mxu0 %v504
  %524 = vmatprep.subr.mxu0 0.0
  %525 = vmatpush1.msra.mxu0 %v506
  %526 = vmatprep.subr.mxu0 0.0
  %527 = vmatpush1.msra.mxu0 %v520
  %528 = vmatprep.subr.mxu0 0.0
  %529 = vmatpush1.msra.mxu0 0.0
  %530 = vmatprep.subr.mxu0 0.0
  %531 = vmatpush1.msra.mxu0 0.0
  %532 = vmatprep.subr.mxu0 0.0
  %533 = vmatpush1.msra.mxu0 0.0
  %534 = vmatprep.subr.mxu0 0.0
  %535 = vmatpush1.msra.mxu0 0.0
  %536 = vmatprep.subr.mxu0 0.0
  %537 = vmatpush1.msra.mxu0 0.0
  %538 = vmatprep.subr.mxu0 0.0
  %539 = vmatpush1.msra.mxu0 0.0
  %540 = vmatprep.subr.mxu0 0.0
  %541 = vmatpush1.msra.mxu0 0.0
  %542 = vmatprep.subr.mxu0 0.0
  %543 = vmatpush1.msra.mxu0 0.0
  %544 = vmatprep.subr.mxu0 0.0
  %545 = vmatpush1.msra.mxu0 0.0
  %546 = vmatprep.subr.mxu0 0.0
  %547 = vmatpush1.msra.mxu0 0.0
  %548 = vmatprep.subr.mxu0 0.0
  %549 = vmatpush1.msra.mxu0 0.0
  %550 = vmatprep.subr.mxu0 0.0
  %551 = vmatpush1.msra.mxu0 0.0
  %552 = vmatprep.subr.mxu0 0.0
  %553 = vmatpush1.msra.mxu0 0.0
  %554 = vmatprep.subr.mxu0 0.0
  %555 = vmatpush1.msra.mxu0 0.0
  %556 = vmatprep.subr.mxu0 0.0
  %557 = vmatpush1.msra.mxu0 0.0
  %558 = vmatprep.subr.mxu0 0.0
  %559 = vmatpush1.msra.mxu0 0.0
  %560 = vmatprep.subr.mxu0 0.0
  %561 = vmatpush1.msra.mxu0 0.0
  %562 = vmatprep.subr.mxu0 0.0
  %563 = vmatpush1.msra.mxu0 0.0
  %564 = vmatprep.subr.mxu0 0.0
  %565 = vmatpush1.msra.mxu0 0.0
  %566 = vmatprep.subr.mxu0 0.0
  %567 = vmatpush1.msra.mxu0 0.0
  %568 = vmatprep.subr.mxu0 0.0
  %569 = vmatpush1.msra.mxu0 0.0
  %570 = vmatprep.subr.mxu0 0.0
  %571 = vmatpush1.msra.mxu0 0.0
  %572 = vmatprep.subr.mxu0 0.0
  %573 = vmatpush1.msra.mxu0 0.0
  %574 = vmatprep.subr.mxu0 0.0
  %575 = vmatpush1.msra.mxu0 0.0
  %576 = vmatprep.subr.mxu0 0.0
  %577 = vmatpush1.msra.mxu0 0.0
  %578 = vmatprep.subr.mxu0 0.0
  %579 = vmatpush1.msra.mxu0 0.0
  %580 = vmatprep.subr.mxu0 0.0
  %581 = vmatpush1.msra.mxu0 0.0
  %582 = vmatprep.subr.mxu0 0.0
  %583 = vmatpush1.msra.mxu0 0.0
  %584 = vmatprep.subr.mxu0 0.0
  %585 = vmatpush1.msra.mxu0 0.0
  %586 = vmatprep.mubr.f32.mxu0 0.0
  %587 = vmatmul.mubr.f32.gmra.mrb[0].mxu0 %v512
  %v588 = vpop.f32.mrb[0].mxu0
  %v589 = vadd.f32 0.0, %v588
  %v590 = vpop.f32.mrb[0].mxu0
  %591 = vmatprep.mubr.f32.mxu0 0.0
  %592 = vmatmul.mubr.f32.gmra.mrb[0].mxu0 %v515
  %v593 = vpop.f32.mrb[0].mxu0
  %v594 = vadd.f32 0.0, %v593
  %v595 = vpop.f32.mrb[0].mxu0
  %596 = vmatprep.mubr.f32.mxu0 0.0
  %597 = vmatmul.mubr.f32.gmra.mrb[0].mxu0 %v518
  %v598 = vpop.f32.mrb[0].mxu0
  %v599 = vadd.f32 0.0, %v598
  %v600 = vpop.f32.mrb[0].mxu0
  %601 = vdwg.mxu0
  %v602 = vld [vmem:[%s17] sm:$0xff]
  %v603 = vld [vmem:[%s17 + $0x8] sm:$0x3]
  %v604 = vld [vmem:[%s19] sm:$0x1]
  %v606 = vlaneseq
  %v607 = vshrl.u32 %v606, 7
  %v608 = vsub.s32 0, %v607
  %v609 = vrot.slane %v604, %v608
  %v612 = vsel %vm267, %v589, 0
  %v615 = vsel %vm267, %v594, 0
  %v618 = vsel %vm267, %v599, 0
  %v621 = vsel %vm277, %v603, 0
  %623 = vmatprep.subr.mxu0 0.0
  %624 = vmatpush1.msra.mxu0 %v602
  %625 = vmatprep.subr.mxu0 0.0
  %626 = vmatpush1.msra.mxu0 %v621
  %627 = vmatprep.subr.mxu0 0.0
  %628 = vmatpush1.msra.mxu0 0.0
  %629 = vmatprep.subr.mxu0 0.0
  %630 = vmatpush1.msra.mxu0 0.0
  %631 = vmatprep.subr.mxu0 0.0
  %632 = vmatpush1.msra.mxu0 0.0
  %633 = vmatprep.subr.mxu0 0.0
  %634 = vmatpush1.msra.mxu0 0.0
  %635 = vmatprep.subr.mxu0 0.0
  %636 = vmatpush1.msra.mxu0 0.0
  %637 = vmatprep.subr.mxu0 0.0
  %638 = vmatpush1.msra.mxu0 0.0
  %639 = vmatprep.subr.mxu0 0.0
  %640 = vmatpush1.msra.mxu0 0.0
  %641 = vmatprep.subr.mxu0 0.0
  %642 = vmatpush1.msra.mxu0 0.0
  %643 = vmatprep.subr.mxu0 0.0
  %644 = vmatpush1.msra.mxu0 0.0
  %645 = vmatprep.subr.mxu0 0.0
  %646 = vmatpush1.msra.mxu0 0.0
  %647 = vmatprep.subr.mxu0 0.0
  %648 = vmatpush1.msra.mxu0 0.0
  %649 = vmatprep.subr.mxu0 0.0
  %650 = vmatpush1.msra.mxu0 0.0
  %651 = vmatprep.subr.mxu0 0.0
  %652 = vmatpush1.msra.mxu0 0.0
  %653 = vmatprep.subr.mxu0 0.0
  %654 = vmatpush1.msra.mxu0 0.0
  %655 = vmatprep.subr.mxu0 0.0
  %656 = vmatpush1.msra.mxu0 0.0
  %657 = vmatprep.subr.mxu0 0.0
  %658 = vmatpush1.msra.mxu0 0.0
  %659 = vmatprep.subr.mxu0 0.0
  %660 = vmatpush1.msra.mxu0 0.0
  %661 = vmatprep.subr.mxu0 0.0
  %662 = vmatpush1.msra.mxu0 0.0
  %663 = vmatprep.subr.mxu0 0.0
  %664 = vmatpush1.msra.mxu0 0.0
  %665 = vmatprep.subr.mxu0 0.0
  %666 = vmatpush1.msra.mxu0 0.0
  %667 = vmatprep.subr.mxu0 0.0
  %668 = vmatpush1.msra.mxu0 0.0
  %669 = vmatprep.subr.mxu0 0.0
  %670 = vmatpush1.msra.mxu0 0.0
  %671 = vmatprep.subr.mxu0 0.0
  %672 = vmatpush1.msra.mxu0 0.0
  %673 = vmatprep.subr.mxu0 0.0
  %674 = vmatpush1.msra.mxu0 0.0
  %675 = vmatprep.subr.mxu0 0.0
  %676 = vmatpush1.msra.mxu0 0.0
  %677 = vmatprep.subr.mxu0 0.0
  %678 = vmatpush1.msra.mxu0 0.0
  %679 = vmatprep.subr.mxu0 0.0
  %680 = vmatpush1.msra.mxu0 0.0
  %681 = vmatprep.subr.mxu0 0.0
  %682 = vmatpush1.msra.mxu0 0.0
  %683 = vmatprep.subr.mxu0 0.0
  %684 = vmatpush1.msra.mxu0 0.0
  %685 = vmatprep.subr.mxu0 0.0
  %686 = vmatpush1.msra.mxu0 0.0
  %687 = vmatprep.mubr.f32.mxu0 0.0
  %688 = vmatmul.mubr.f32.gmra.mrb[0].mxu0 %v612
  %v689 = vpop.f32.mrb[0].mxu0
  %v690 = vadd.f32 %v609, %v689
  %v691 = vpop.f32.mrb[0].mxu0
  %692 = vmatprep.mubr.f32.mxu0 0.0
  %693 = vmatmul.mubr.f32.gmra.mrb[0].mxu0 %v615
  %v694 = vpop.f32.mrb[0].mxu0
  %v695 = vadd.f32 %v609, %v694
  %v696 = vpop.f32.mrb[0].mxu0
  %697 = vmatprep.mubr.f32.mxu0 0.0
  %698 = vmatmul.mubr.f32.gmra.mrb[0].mxu0 %v618
  %v699 = vpop.f32.mrb[0].mxu0
  %v700 = vadd.f32 %v609, %v699
  %v701 = vpop.f32.mrb[0].mxu0
  %702 = vdwg.mxu0
  %v703 = vadd.f32 %v252, %v690
  %v704 = vadd.f32 %v253, %v695
  %v705 = vadd.f32 %v254, %v700
  %v706 = vld [vmem:[%s21] sm:$0x1]
  %v707 = vld [vmem:[%s23] sm:$0x1]
  %v708 = vsel %vm267, %v703, 0.0
  %709 = vadd.xlane.f32.xlu0 %v708
  %v710 = vpop.xlane.xlu0 %709
  %v711 = vsel %vm267, %v704, 0.0
  %712 = vadd.xlane.f32.xlu0 %v711
  %v713 = vpop.xlane.xlu0 %712
  %vm714 = vcmask 74752
  %v715 = vsel %vm714, %v705, 0.0
  %716 = vadd.xlane.f32.xlu0 %v715
  %v717 = vpop.xlane.xlu0 %716
  %v718 = vrcp.pop 10.0
  %v719 = vmul.f32 %v710, %v718
  %v720 = vmul.f32 %v713, %v718
  %v721 = vmul.f32 %v717, %v718
  %v722 = vsub.f32 %v703, %v719
  %v723 = vsub.f32 %v704, %v720
  %v724 = vsub.f32 %v705, %v721
  %v725 = vmul.f32 %v722, %v722
  %v726 = vmul.f32 %v723, %v723
  %v727 = vmul.f32 %v724, %v724
  %v728 = vsel %vm267, %v725, 0.0
  %729 = vadd.xlane.f32.xlu0 %v728
  %v730 = vpop.xlane.xlu0 %729
  %v731 = vsel %vm267, %v726, 0.0
  %732 = vadd.xlane.f32.xlu0 %v731
  %v733 = vpop.xlane.xlu0 %732
  %v734 = vsel %vm714, %v727, 0.0
  %735 = vadd.xlane.f32.xlu0 %v734
  %v736 = vpop.xlane.xlu0 %735
  %v737 = vmul.f32 %v730, %v718
  %v738 = vmul.f32 %v733, %v718
  %v739 = vmul.f32 %v736, %v718
  %v740 = vadd.f32 %v737, 1e-05
  %v741 = vadd.f32 %v738, 1e-05
  %v742 = vadd.f32 %v739, 1e-05
  %v743 = vrsqrt.pop %v740
  %v744 = vrsqrt.pop %v741
  %v745 = vrsqrt.pop %v742
  %v746 = vmul.f32 %v722, %v743
  %v747 = vmul.f32 %v723, %v744
  %v748 = vmul.f32 %v724, %v745
  %v750 = vlaneseq
  %v751 = vshrl.u32 %v750, 7
  %v752 = vsub.s32 0, %v751
  %v753 = vrot.slane %v706, %v752
  %v755 = vmul.f32 %v746, %v753
  %v756 = vmul.f32 %v747, %v753
  %v757 = vmul.f32 %v748, %v753
  %v759 = vlaneseq
  %v760 = vshrl.u32 %v759, 7
  %v761 = vsub.s32 0, %v760
  %v762 = vrot.slane %v707, %v761
  %v764 = vadd.f32 %v755, %v762
  %v765 = vadd.f32 %v756, %v762
  %v766 = vadd.f32 %v757, %v762
  %v767 = vld [vmem:[%s25] sm:$0xff]
  %v768 = vld [vmem:[%s25 + $0x8] sm:$0x3]
  %v769 = vld [vmem:[%s27] sm:$0x1]
  %v771 = vlaneseq
  %v772 = vshrl.u32 %v771, 7
  %v773 = vsub.s32 0, %v772
  %v774 = vrot.slane %v769, %v773
  %v777 = vsel %vm267, %v764, 0
  %v780 = vsel %vm267, %v765, 0
  %v783 = vsel %vm267, %v766, 0
  %v786 = vsel %vm277, %v768, 0
  %788 = vmatprep.subr.mxu0 0.0
  %789 = vmatpush1.msra.mxu0 %v767
  %790 = vmatprep.subr.mxu0 0.0
  %791 = vmatpush1.msra.mxu0 %v786
  %792 = vmatprep.subr.mxu0 0.0
  %793 = vmatpush1.msra.mxu0 0.0
  %794 = vmatprep.subr.mxu0 0.0
  %795 = vmatpush1.msra.mxu0 0.0
  %796 = vmatprep.subr.mxu0 0.0
  %797 = vmatpush1.msra.mxu0 0.0
  %798 = vmatprep.subr.mxu0 0.0
  %799 = vmatpush1.msra.mxu0 0.0
  %800 = vmatprep.subr.mxu0 0.0
  %801 = vmatpush1.msra.mxu0 0.0
  %802 = vmatprep.subr.mxu0 0.0
  %803 = vmatpush1.msra.mxu0 0.0
  %804 = vmatprep.subr.mxu0 0.0
  %805 = vmatpush1.msra.mxu0 0.0
  %806 = vmatprep.subr.mxu0 0.0
  %807 = vmatpush1.msra.mxu0 0.0
  %808 = vmatprep.subr.mxu0 0.0
  %809 = vmatpush1.msra.mxu0 0.0
  %810 = vmatprep.subr.mxu0 0.0
  %811 = vmatpush1.msra.mxu0 0.0
  %812 = vmatprep.subr.mxu0 0.0
  %813 = vmatpush1.msra.mxu0 0.0
  %814 = vmatprep.subr.mxu0 0.0
  %815 = vmatpush1.msra.mxu0 0.0
  %816 = vmatprep.subr.mxu0 0.0
  %817 = vmatpush1.msra.mxu0 0.0
  %818 = vmatprep.subr.mxu0 0.0
  %819 = vmatpush1.msra.mxu0 0.0
  %820 = vmatprep.subr.mxu0 0.0
  %821 = vmatpush1.msra.mxu0 0.0
  %822 = vmatprep.subr.mxu0 0.0
  %823 = vmatpush1.msra.mxu0 0.0
  %824 = vmatprep.subr.mxu0 0.0
  %825 = vmatpush1.msra.mxu0 0.0
  %826 = vmatprep.subr.mxu0 0.0
  %827 = vmatpush1.msra.mxu0 0.0
  %828 = vmatprep.subr.mxu0 0.0
  %829 = vmatpush1.msra.mxu0 0.0
  %830 = vmatprep.subr.mxu0 0.0
  %831 = vmatpush1.msra.mxu0 0.0
  %832 = vmatprep.subr.mxu0 0.0
  %833 = vmatpush1.msra.mxu0 0.0
  %834 = vmatprep.subr.mxu0 0.0
  %835 = vmatpush1.msra.mxu0 0.0
  %836 = vmatprep.subr.mxu0 0.0
  %837 = vmatpush1.msra.mxu0 0.0
  %838 = vmatprep.subr.mxu0 0.0
  %839 = vmatpush1.msra.mxu0 0.0
  %840 = vmatprep.subr.mxu0 0.0
  %841 = vmatpush1.msra.mxu0 0.0
  %842 = vmatprep.subr.mxu0 0.0
  %843 = vmatpush1.msra.mxu0 0.0
  %844 = vmatprep.subr.mxu0 0.0
  %845 = vmatpush1.msra.mxu0 0.0
  %846 = vmatprep.subr.mxu0 0.0
  %847 = vmatpush1.msra.mxu0 0.0
  %848 = vmatprep.subr.mxu0 0.0
  %849 = vmatpush1.msra.mxu0 0.0
  %850 = vmatprep.subr.mxu0 0.0
  %851 = vmatpush1.msra.mxu0 0.0
  %852 = vmatprep.mubr.f32.mxu0 0.0
  %853 = vmatmul.mubr.f32.gmra.mrb[0].mxu0 %v777
  %v854 = vpop.f32.mrb[0].mxu0
  %v855 = vadd.f32 %v774, %v854
  %v856 = vpop.f32.mrb[0].mxu0
  %857 = vmatprep.mubr.f32.mxu0 0.0
  %858 = vmatmul.mubr.f32.gmra.mrb[0].mxu0 %v780
  %v859 = vpop.f32.mrb[0].mxu0
  %v860 = vadd.f32 %v774, %v859
  %v861 = vpop.f32.mrb[0].mxu0
  %862 = vmatprep.mubr.f32.mxu0 0.0
  %863 = vmatmul.mubr.f32.gmra.mrb[0].mxu0 %v783
  %v864 = vpop.f32.mrb[0].mxu0
  %v865 = vadd.f32 %v774, %v864
  %v866 = vpop.f32.mrb[0].mxu0
  %867 = vdwg.mxu0
  %vm868 = vcmp.ge.f32.partialorder %v855, 0.0
  %vm869 = vcmp.ge.f32.partialorder %v860, 0.0
  %vm870 = vcmp.ge.f32.partialorder %v865, 0.0
  %v871 = vmul.f32 %v855, 0.2
  %v872 = vmul.f32 %v860, 0.2
  %v873 = vmul.f32 %v865, 0.2
  %v874 = vsel %vm868, %v855, %v871
  %v875 = vsel %vm869, %v860, %v872
  %v876 = vsel %vm870, %v865, %v873
  %v877 = vld [vmem:[%s29] sm:$0xff]
  %v878 = vld [vmem:[%s29 + $0x8] sm:$0xff]
  %v879 = vld [vmem:[%s29 + $0x10] sm:$0xff]
  %v880 = vld [vmem:[%s29 + $0x18] sm:$0xff]
  %v881 = vld [vmem:[%s31] sm:$0x1]
  %v883 = vlaneseq
  %v884 = vshrl.u32 %v883, 7
  %v885 = vsub.s32 0, %v884
  %v886 = vrot.slane %v881, %v885
  %vm888 = vcmask 261120
  %v890 = vsel %vm888, %v874, 0
  %v893 = vsel %vm888, %v875, 0
  %v896 = vsel %vm888, %v876, 0
  %898 = vmatprep.subr.mxu0 0.0
  %899 = vmatpush1.msra.mxu0 %v877
  %900 = vmatprep.subr.mxu0 0.0
  %901 = vmatpush1.msra.mxu0 %v878
  %902 = vmatprep.subr.mxu0 0.0
  %903 = vmatpush1.msra.mxu0 %v879
  %904 = vmatprep.subr.mxu0 0.0
  %905 = vmatpush1.msra.mxu0 %v880
  %906 = vmatprep.subr.mxu0 0.0
  %907 = vmatpush1.msra.mxu0 0.0
  %908 = vmatprep.subr.mxu0 0.0
  %909 = vmatpush1.msra.mxu0 0.0
  %910 = vmatprep.subr.mxu0 0.0
  %911 = vmatpush1.msra.mxu0 0.0
  %912 = vmatprep.subr.mxu0 0.0
  %913 = vmatpush1.msra.mxu0 0.0
  %914 = vmatprep.subr.mxu0 0.0
  %915 = vmatpush1.msra.mxu0 0.0
  %916 = vmatprep.subr.mxu0 0.0
  %917 = vmatpush1.msra.mxu0 0.0
  %918 = vmatprep.subr.mxu0 0.0
  %919 = vmatpush1.msra.mxu0 0.0
  %920 = vmatprep.subr.mxu0 0.0
  %921 = vmatpush1.msra.mxu0 0.0
  %922 = vmatprep.subr.mxu0 0.0
  %923 = vmatpush1.msra.mxu0 0.0
  %924 = vmatprep.subr.mxu0 0.0
  %925 = vmatpush1.msra.mxu0 0.0
  %926 = vmatprep.subr.mxu0 0.0
  %927 = vmatpush1.msra.mxu0 0.0
  %928 = vmatprep.subr.mxu0 0.0
  %929 = vmatpush1.msra.mxu0 0.0
  %930 = vmatprep.subr.mxu0 0.0
  %931 = vmatpush1.msra.mxu0 0.0
  %932 = vmatprep.subr.mxu0 0.0
  %933 = vmatpush1.msra.mxu0 0.0
  %934 = vmatprep.subr.mxu0 0.0
  %935 = vmatpush1.msra.mxu0 0.0
  %936 = vmatprep.subr.mxu0 0.0
  %937 = vmatpush1.msra.mxu0 0.0
  %938 = vmatprep.subr.mxu0 0.0
  %939 = vmatpush1.msra.mxu0 0.0
  %940 = vmatprep.subr.mxu0 0.0
  %941 = vmatpush1.msra.mxu0 0.0
  %942 = vmatprep.subr.mxu0 0.0
  %943 = vmatpush1.msra.mxu0 0.0
  %944 = vmatprep.subr.mxu0 0.0
  %945 = vmatpush1.msra.mxu0 0.0
  %946 = vmatprep.subr.mxu0 0.0
  %947 = vmatpush1.msra.mxu0 0.0
  %948 = vmatprep.subr.mxu0 0.0
  %949 = vmatpush1.msra.mxu0 0.0
  %950 = vmatprep.subr.mxu0 0.0
  %951 = vmatpush1.msra.mxu0 0.0
  %952 = vmatprep.subr.mxu0 0.0
  %953 = vmatpush1.msra.mxu0 0.0
  %954 = vmatprep.subr.mxu0 0.0
  %955 = vmatpush1.msra.mxu0 0.0
  %956 = vmatprep.subr.mxu0 0.0
  %957 = vmatpush1.msra.mxu0 0.0
  %958 = vmatprep.subr.mxu0 0.0
  %959 = vmatpush1.msra.mxu0 0.0
  %960 = vmatprep.subr.mxu0 0.0
  %961 = vmatpush1.msra.mxu0 0.0
  %962 = vmatprep.mubr.f32.mxu0 0.0
  %963 = vmatmul.mubr.f32.gmra.mrb[0].mxu0 %v890
  %v964 = vpop.f32.mrb[0].mxu0
  %v965 = vadd.f32 %v886, %v964
  %v966 = vpop.f32.mrb[0].mxu0
  %967 = vmatprep.mubr.f32.mxu0 0.0
  %968 = vmatmul.mubr.f32.gmra.mrb[0].mxu0 %v893
  %v969 = vpop.f32.mrb[0].mxu0
  %v970 = vadd.f32 %v886, %v969
  %v971 = vpop.f32.mrb[0].mxu0
  %972 = vmatprep.mubr.f32.mxu0 0.0
  %973 = vmatmul.mubr.f32.gmra.mrb[0].mxu0 %v896
  %v974 = vpop.f32.mrb[0].mxu0
  %v975 = vadd.f32 %v886, %v974
  %v976 = vpop.f32.mrb[0].mxu0
  %977 = vdwg.mxu0
  %v978 = vadd.f32 %v764, %v965
  %v979 = vadd.f32 %v765, %v970
  %v980 = vadd.f32 %v766, %v975
  %v981 = vld [vmem:[%s33] sm:$0x1]
  %v982 = vld [vmem:[%s35] sm:$0x1]
  %v983 = vsel %vm267, %v978, 0.0
  %984 = vadd.xlane.f32.xlu0 %v983
  %v985 = vpop.xlane.xlu0 %984
  %v986 = vsel %vm267, %v979, 0.0
  %987 = vadd.xlane.f32.xlu0 %v986
  %v988 = vpop.xlane.xlu0 %987
  %v989 = vsel %vm714, %v980, 0.0
  %990 = vadd.xlane.f32.xlu0 %v989
  %v991 = vpop.xlane.xlu0 %990
  %v992 = vmul.f32 %v985, %v718
  %v993 = vmul.f32 %v988, %v718
  %v994 = vmul.f32 %v991, %v718
  %v995 = vsub.f32 %v978, %v992
  %v996 = vsub.f32 %v979, %v993
  %v997 = vsub.f32 %v980, %v994
  %v998 = vmul.f32 %v995, %v995
  %v999 = vmul.f32 %v996, %v996
  %v1000 = vmul.f32 %v997, %v997
  %v1001 = vsel %vm267, %v998, 0.0
  %1002 = vadd.xlane.f32.xlu0 %v1001
  %v1003 = vpop.xlane.xlu0 %1002
  %v1004 = vsel %vm267, %v999, 0.0
  %1005 = vadd.xlane.f32.xlu0 %v1004
  %v1006 = vpop.xlane.xlu0 %1005
  %v1007 = vsel %vm714, %v1000, 0.0
  %1008 = vadd.xlane.f32.xlu0 %v1007
  %v1009 = vpop.xlane.xlu0 %1008
  %v1010 = vmul.f32 %v1003, %v718
  %v1011 = vmul.f32 %v1006, %v718
  %v1012 = vmul.f32 %v1009, %v718
  %v1013 = vadd.f32 %v1010, 1e-05
  %v1014 = vadd.f32 %v1011, 1e-05
  %v1015 = vadd.f32 %v1012, 1e-05
  %v1016 = vrsqrt.pop %v1013
  %v1017 = vrsqrt.pop %v1014
  %v1018 = vrsqrt.pop %v1015
  %v1019 = vmul.f32 %v995, %v1016
  %v1020 = vmul.f32 %v996, %v1017
  %v1021 = vmul.f32 %v997, %v1018
  %v1023 = vlaneseq
  %v1024 = vshrl.u32 %v1023, 7
  %v1025 = vsub.s32 0, %v1024
  %v1026 = vrot.slane %v981, %v1025
  %v1028 = vmul.f32 %v1019, %v1026
  %v1029 = vmul.f32 %v1020, %v1026
  %v1030 = vmul.f32 %v1021, %v1026
  %v1032 = vlaneseq
  %v1033 = vshrl.u32 %v1032, 7
  %v1034 = vsub.s32 0, %v1033
  %v1035 = vrot.slane %v982, %v1034
  %v1037 = vadd.f32 %v1028, %v1035
  %v1038 = vadd.f32 %v1029, %v1035
  %v1039 = vadd.f32 %v1030, %v1035
  %v1040 = vld [vmem:[%s37] sm:$0xff]
  %v1041 = vld [vmem:[%s37 + $0x8] sm:$0x3]
  %v1042 = vld [vmem:[%s39] sm:$0x1]
  %v1044 = vlaneseq
  %v1045 = vshrl.u32 %v1044, 7
  %v1046 = vsub.s32 0, %v1045
  %v1047 = vrot.slane %v1042, %v1046
  %v1050 = vsel %vm267, %v1037, 0
  %v1053 = vsel %vm267, %v1038, 0
  %v1056 = vsel %vm267, %v1039, 0
  %v1059 = vsel %vm277, %v1041, 0
  %1061 = vmatprep.subr.mxu0 0.0
  %1062 = vmatpush1.msra.mxu0 %v1040
  %1063 = vmatprep.subr.mxu0 0.0
  %1064 = vmatpush1.msra.mxu0 %v1059
  %1065 = vmatprep.subr.mxu0 0.0
  %1066 = vmatpush1.msra.mxu0 0.0
  %1067 = vmatprep.subr.mxu0 0.0
  %1068 = vmatpush1.msra.mxu0 0.0
  %1069 = vmatprep.subr.mxu0 0.0
  %1070 = vmatpush1.msra.mxu0 0.0
  %1071 = vmatprep.subr.mxu0 0.0
  %1072 = vmatpush1.msra.mxu0 0.0
  %1073 = vmatprep.subr.mxu0 0.0
  %1074 = vmatpush1.msra.mxu0 0.0
  %1075 = vmatprep.subr.mxu0 0.0
  %1076 = vmatpush1.msra.mxu0 0.0
  %1077 = vmatprep.subr.mxu0 0.0
  %1078 = vmatpush1.msra.mxu0 0.0
  %1079 = vmatprep.subr.mxu0 0.0
  %1080 = vmatpush1.msra.mxu0 0.0
  %1081 = vmatprep.subr.mxu0 0.0
  %1082 = vmatpush1.msra.mxu0 0.0
  %1083 = vmatprep.subr.mxu0 0.0
  %1084 = vmatpush1.msra.mxu0 0.0
  %1085 = vmatprep.subr.mxu0 0.0
  %1086 = vmatpush1.msra.mxu0 0.0
  %1087 = vmatprep.subr.mxu0 0.0
  %1088 = vmatpush1.msra.mxu0 0.0
  %1089 = vmatprep.subr.mxu0 0.0
  %1090 = vmatpush1.msra.mxu0 0.0
  %1091 = vmatprep.subr.mxu0 0.0
  %1092 = vmatpush1.msra.mxu0 0.0
  %1093 = vmatprep.subr.mxu0 0.0
  %1094 = vmatpush1.msra.mxu0 0.0
  %1095 = vmatprep.subr.mxu0 0.0
  %1096 = vmatpush1.msra.mxu0 0.0
  %1097 = vmatprep.subr.mxu0 0.0
  %1098 = vmatpush1.msra.mxu0 0.0
  %1099 = vmatprep.subr.mxu0 0.0
  %1100 = vmatpush1.msra.mxu0 0.0
  %1101 = vmatprep.subr.mxu0 0.0
  %1102 = vmatpush1.msra.mxu0 0.0
  %1103 = vmatprep.subr.mxu0 0.0
  %1104 = vmatpush1.msra.mxu0 0.0
  %1105 = vmatprep.subr.mxu0 0.0
  %1106 = vmatpush1.msra.mxu0 0.0
  %1107 = vmatprep.subr.mxu0 0.0
  %1108 = vmatpush1.msra.mxu0 0.0
  %1109 = vmatprep.subr.mxu0 0.0
  %1110 = vmatpush1.msra.mxu0 0.0
  %1111 = vmatprep.subr.mxu0 0.0
  %1112 = vmatpush1.msra.mxu0 0.0
  %1113 = vmatprep.subr.mxu0 0.0
  %1114 = vmatpush1.msra.mxu0 0.0
  %1115 = vmatprep.subr.mxu0 0.0
  %1116 = vmatpush1.msra.mxu0 0.0
  %1117 = vmatprep.subr.mxu0 0.0
  %1118 = vmatpush1.msra.mxu0 0.0
  %1119 = vmatprep.subr.mxu0 0.0
  %1120 = vmatpush1.msra.mxu0 0.0
  %1121 = vmatprep.subr.mxu0 0.0
  %1122 = vmatpush1.msra.mxu0 0.0
  %1123 = vmatprep.subr.mxu0 0.0
  %1124 = vmatpush1.msra.mxu0 0.0
  %1125 = vmatprep.mubr.f32.mxu0 0.0
  %1126 = vmatmul.mubr.f32.gmra.mrb[0].mxu0 %v1050
  %v1127 = vpop.f32.mrb[0].mxu0
  %v1128 = vadd.f32 %v1047, %v1127
  %v1129 = vpop.f32.mrb[0].mxu0
  %1130 = vmatprep.mubr.f32.mxu0 0.0
  %1131 = vmatmul.mubr.f32.gmra.mrb[0].mxu0 %v1053
  %v1132 = vpop.f32.mrb[0].mxu0
  %v1133 = vadd.f32 %v1047, %v1132
  %v1134 = vpop.f32.mrb[0].mxu0
  %1135 = vmatprep.mubr.f32.mxu0 0.0
  %1136 = vmatmul.mubr.f32.gmra.mrb[0].mxu0 %v1056
  %v1137 = vpop.f32.mrb[0].mxu0
  %v1138 = vadd.f32 %v1047, %v1137
  %v1139 = vpop.f32.mrb[0].mxu0
  %1140 = vdwg.mxu0
  %1144 = vrot.lane.b32.xlu0 %v1128, 118
  %v1145 = vpop.permute.xlu0 %1144
  %1146 = vrot.lane.b32.xlu0 %v1133, 118
  %v1147 = vpop.permute.xlu0 %1146
  %1148 = vrot.lane.b32.xlu0 %v1138, 118
  %v1149 = vpop.permute.xlu0 %1148
  %v1150 = vsel %vm267, %v1128, 0
  %v1152 = vsel %vm267, %v1133, 0
  %v1154 = vsel %vm267, %v1138, 0
  %v1156 = vsel %vm267, %v1145, 0
  %v1158 = vsel %vm267, %v1147, 0
  %v1160 = vsel %vm267, %v1149, 0
  %1162 = vmatprep.subr.mxu0 0.0
  %1163 = vmatpush1.xpose.msra.mxu0 %v1156
  %1164 = vmatprep.subr.mxu0 0.0
  %1165 = vmatpush1.xpose.msra.mxu0 %v1158
  %1166 = vmatprep.subr.mxu0 0.0
  %1167 = vmatpush1.xpose.msra.mxu0 %v1160
  %1168 = vmatprep.subr.mxu0 0.0
  %1169 = vmatpush1.xpose.msra.mxu0 0.0
  %1170 = vmatprep.subr.mxu0 0.0
  %1171 = vmatpush1.xpose.msra.mxu0 0.0
  %1172 = vmatprep.subr.mxu0 0.0
  %1173 = vmatpush1.xpose.msra.mxu0 0.0
  %1174 = vmatprep.subr.mxu0 0.0
  %1175 = vmatpush1.xpose.msra.mxu0 0.0
  %1176 = vmatprep.subr.mxu0 0.0
  %1177 = vmatpush1.xpose.msra.mxu0 0.0
  %1178 = vmatprep.subr.mxu0 0.0
  %1179 = vmatpush1.xpose.msra.mxu0 0.0
  %1180 = vmatprep.subr.mxu0 0.0
  %1181 = vmatpush1.xpose.msra.mxu0 0.0
  %1182 = vmatprep.subr.mxu0 0.0
  %1183 = vmatpush1.xpose.msra.mxu0 0.0
  %1184 = vmatprep.subr.mxu0 0.0
  %1185 = vmatpush1.xpose.msra.mxu0 0.0
  %1186 = vmatprep.subr.mxu0 0.0
  %1187 = vmatpush1.xpose.msra.mxu0 0.0
  %1188 = vmatprep.subr.mxu0 0.0
  %1189 = vmatpush1.xpose.msra.mxu0 0.0
  %1190 = vmatprep.subr.mxu0 0.0
  %1191 = vmatpush1.xpose.msra.mxu0 0.0
  %1192 = vmatprep.subr.mxu0 0.0
  %1193 = vmatpush1.xpose.msra.mxu0 0.0
  %1194 = vmatprep.subr.mxu0 0.0
  %1195 = vmatpush1.xpose.msra.mxu0 0.0
  %1196 = vmatprep.subr.mxu0 0.0
  %1197 = vmatpush1.xpose.msra.mxu0 0.0
  %1198 = vmatprep.subr.mxu0 0.0
  %1199 = vmatpush1.xpose.msra.mxu0 0.0
  %1200 = vmatprep.subr.mxu0 0.0
  %1201 = vmatpush1.xpose.msra.mxu0 0.0
  %1202 = vmatprep.subr.mxu0 0.0
  %1203 = vmatpush1.xpose.msra.mxu0 0.0
  %1204 = vmatprep.subr.mxu0 0.0
  %1205 = vmatpush1.xpose.msra.mxu0 0.0
  %1206 = vmatprep.subr.mxu0 0.0
  %1207 = vmatpush1.xpose.msra.mxu0 0.0
  %1208 = vmatprep.subr.mxu0 0.0
  %1209 = vmatpush1.xpose.msra.mxu0 0.0
  %1210 = vmatprep.subr.mxu0 0.0
  %1211 = vmatpush1.xpose.msra.mxu0 0.0
  %1212 = vmatprep.subr.mxu0 0.0
  %1213 = vmatpush1.xpose.msra.mxu0 0.0
  %1214 = vmatprep.subr.mxu0 0.0
  %1215 = vmatpush1.xpose.msra.mxu0 0.0
  %1216 = vmatprep.subr.mxu0 0.0
  %1217 = vmatpush1.xpose.msra.mxu0 0.0
  %1218 = vmatprep.subr.mxu0 0.0
  %1219 = vmatpush1.xpose.msra.mxu0 0.0
  %1220 = vmatprep.subr.mxu0 0.0
  %1221 = vmatpush1.xpose.msra.mxu0 0.0
  %1222 = vmatprep.subr.mxu0 0.0
  %1223 = vmatpush1.xpose.msra.mxu0 0.0
  %1224 = vmatprep.subr.mxu0 0.0
  %1225 = vmatpush1.xpose.msra.mxu0 0.0
  %1226 = vmatprep.mubr.f32.mxu0 0.0
  %1227 = vmatmul.mubr.f32.gmra.mrb[0].mxu0 %v1150
  %v1228 = vpop.f32.mrb[0].mxu0
  %v1229 = vadd.f32 0.0, %v1228
  %v1230 = vpop.f32.mrb[0].mxu0
  %1231 = vmatprep.mubr.f32.mxu0 0.0
  %1232 = vmatmul.mubr.f32.gmra.mrb[0].mxu0 %v1152
  %v1233 = vpop.f32.mrb[0].mxu0
  %v1234 = vadd.f32 0.0, %v1233
  %v1235 = vpop.f32.mrb[0].mxu0
  %1236 = vmatprep.mubr.f32.mxu0 0.0
  %1237 = vmatmul.mubr.f32.gmra.mrb[0].mxu0 %v1154
  %v1238 = vpop.f32.mrb[0].mxu0
  %v1239 = vadd.f32 0.0, %v1238
  %v1240 = vpop.f32.mrb[0].mxu0
  %1241 = vdwg.mxu0
  %v1242 = vmul.f32 %v1229, 0.31622776
  %v1243 = vmul.f32 %v1234, 0.31622776
  %v1244 = vmul.f32 %v1239, 0.31622776
  %v1245 = vadd.f32 %v1242, %v255
  %v1246 = vadd.f32 %v1243, %v256
  %v1247 = vadd.f32 %v1244, %v257
  %v1248 = vsel %vm468, %v1245, -inf
  %1249 = vmax.xlane.f32.xlu0 %v1248
  %v1250 = vpop.xlane.xlu0 %1249
  %v1251 = vsel %vm468, %v1246, -inf
  %1252 = vmax.xlane.f32.xlu0 %v1251
  %v1253 = vpop.xlane.xlu0 %1252
  %v1254 = vsel %vm475, %v1247, -inf
  %1255 = vmax.xlane.f32.xlu0 %v1254
  %v1256 = vpop.xlane.xlu0 %1255
  %v1257 = vsub.f32 %v1245, %v1250
  %v1258 = vsub.f32 %v1246, %v1253
  %v1259 = vsub.f32 %v1247, %v1256
  %v1260 = vmul.f32 %v1257, 1.442695
  %v1261 = vpow.pop %v1260
  %v1262 = vmul.f32 %v1258, 1.442695
  %v1263 = vpow.pop %v1262
  %v1264 = vmul.f32 %v1259, 1.442695
  %v1265 = vpow.pop %v1264
  %v1266 = vsel %vm468, %v1261, 0.0
  %1267 = vadd.xlane.f32.xlu0 %v1266
  %v1268 = vpop.xlane.xlu0 %1267
  %v1269 = vsel %vm468, %v1263, 0.0
  %1270 = vadd.xlane.f32.xlu0 %v1269
  %v1271 = vpop.xlane.xlu0 %1270
  %v1272 = vsel %vm475, %v1265, 0.0
  %1273 = vadd.xlane.f32.xlu0 %v1272
  %v1274 = vpop.xlane.xlu0 %1273
  %v1275 = vrcp.pop %v1268
  %v1276 = vrcp.pop %v1271
  %v1277 = vrcp.pop %v1274
  %v1278 = vmul.f32 %v1261, %v1275
  %v1279 = vmul.f32 %v1263, %v1276
  %v1280 = vmul.f32 %v1265, %v1277
  %1281 = vrot.lane.b32.xlu0 %v1128, 108
  %v1282 = vpop.permute.xlu0 %1281
  %1283 = vrot.lane.b32.xlu0 %v1133, 108
  %v1284 = vpop.permute.xlu0 %1283
  %1285 = vrot.lane.b32.xlu0 %v1138, 108
  %v1286 = vpop.permute.xlu0 %1285
  %v1290 = vsel %vm468, %v1278, 0
  %v1293 = vsel %vm468, %v1279, 0
  %v1296 = vsel %vm468, %v1280, 0
  %v1298 = vsel %vm277, %v1286, 0
  %1300 = vmatprep.subr.mxu0 0.0
  %1301 = vmatpush1.msra.mxu0 %v1282
  %1302 = vmatprep.subr.mxu0 0.0
  %1303 = vmatpush1.msra.mxu0 %v1284
  %1304 = vmatprep.subr.mxu0 0.0
  %1305 = vmatpush1.msra.mxu0 %v1298
  %1306 = vmatprep.subr.mxu0 0.0
  %1307 = vmatpush1.msra.mxu0 0.0
  %1308 = vmatprep.subr.mxu0 0.0
  %1309 = vmatpush1.msra.mxu0 0.0
  %1310 = vmatprep.subr.mxu0 0.0
  %1311 = vmatpush1.msra.mxu0 0.0
  %1312 = vmatprep.subr.mxu0 0.0
  %1313 = vmatpush1.msra.mxu0 0.0
  %1314 = vmatprep.subr.mxu0 0.0
  %1315 = vmatpush1.msra.mxu0 0.0
  %1316 = vmatprep.subr.mxu0 0.0
  %1317 = vmatpush1.msra.mxu0 0.0
  %1318 = vmatprep.subr.mxu0 0.0
  %1319 = vmatpush1.msra.mxu0 0.0
  %1320 = vmatprep.subr.mxu0 0.0
  %1321 = vmatpush1.msra.mxu0 0.0
  %1322 = vmatprep.subr.mxu0 0.0
  %1323 = vmatpush1.msra.mxu0 0.0
  %1324 = vmatprep.subr.mxu0 0.0
  %1325 = vmatpush1.msra.mxu0 0.0
  %1326 = vmatprep.subr.mxu0 0.0
  %1327 = vmatpush1.msra.mxu0 0.0
  %1328 = vmatprep.subr.mxu0 0.0
  %1329 = vmatpush1.msra.mxu0 0.0
  %1330 = vmatprep.subr.mxu0 0.0
  %1331 = vmatpush1.msra.mxu0 0.0
  %1332 = vmatprep.subr.mxu0 0.0
  %1333 = vmatpush1.msra.mxu0 0.0
  %1334 = vmatprep.subr.mxu0 0.0
  %1335 = vmatpush1.msra.mxu0 0.0
  %1336 = vmatprep.subr.mxu0 0.0
  %1337 = vmatpush1.msra.mxu0 0.0
  %1338 = vmatprep.subr.mxu0 0.0
  %1339 = vmatpush1.msra.mxu0 0.0
  %1340 = vmatprep.subr.mxu0 0.0
  %1341 = vmatpush1.msra.mxu0 0.0
  %1342 = vmatprep.subr.mxu0 0.0
  %1343 = vmatpush1.msra.mxu0 0.0
  %1344 = vmatprep.subr.mxu0 0.0
  %1345 = vmatpush1.msra.mxu0 0.0
  %1346 = vmatprep.subr.mxu0 0.0
  %1347 = vmatpush1.msra.mxu0 0.0
  %1348 = vmatprep.subr.mxu0 0.0
  %1349 = vmatpush1.msra.mxu0 0.0
  %1350 = vmatprep.subr.mxu0 0.0
  %1351 = vmatpush1.msra.mxu0 0.0
  %1352 = vmatprep.subr.mxu0 0.0
  %1353 = vmatpush1.msra.mxu0 0.0
  %1354 = vmatprep.subr.mxu0 0.0
  %1355 = vmatpush1.msra.mxu0 0.0
  %1356 = vmatprep.subr.mxu0 0.0
  %1357 = vmatpush1.msra.mxu0 0.0
  %1358 = vmatprep.subr.mxu0 0.0
  %1359 = vmatpush1.msra.mxu0 0.0
  %1360 = vmatprep.subr.mxu0 0.0
  %1361 = vmatpush1.msra.mxu0 0.0
  %1362 = vmatprep.subr.mxu0 0.0
  %1363 = vmatpush1.msra.mxu0 0.0
  %1364 = vmatprep.mubr.f32.mxu0 0.0
  %1365 = vmatmul.mubr.f32.gmra.mrb[0].mxu0 %v1290
  %v1366 = vpop.f32.mrb[0].mxu0
  %v1367 = vadd.f32 0.0, %v1366
  %v1368 = vpop.f32.mrb[0].mxu0
  %1369 = vmatprep.mubr.f32.mxu0 0.0
  %1370 = vmatmul.mubr.f32.gmra.mrb[0].mxu0 %v1293
  %v1371 = vpop.f32.mrb[0].mxu0
  %v1372 = vadd.f32 0.0, %v1371
  %v1373 = vpop.f32.mrb[0].mxu0
  %1374 = vmatprep.mubr.f32.mxu0 0.0
  %1375 = vmatmul.mubr.f32.gmra.mrb[0].mxu0 %v1296
  %v1376 = vpop.f32.mrb[0].mxu0
  %v1377 = vadd.f32 0.0, %v1376
  %v1378 = vpop.f32.mrb[0].mxu0
  %1379 = vdwg.mxu0
  %v1380 = vld [vmem:[%s41] sm:$0xff]
  %v1381 = vld [vmem:[%s41 + $0x8] sm:$0x3]
  %v1382 = vld [vmem:[%s43] sm:$0x1]
  %v1384 = vlaneseq
  %v1385 = vshrl.u32 %v1384, 7
  %v1386 = vsub.s32 0, %v1385
  %v1387 = vrot.slane %v1382, %v1386
  %v1390 = vsel %vm267, %v1367, 0
  %v1393 = vsel %vm267, %v1372, 0
  %v1396 = vsel %vm267, %v1377, 0
  %v1399 = vsel %vm277, %v1381, 0
  %1401 = vmatprep.subr.mxu0 0.0
  %1402 = vmatpush1.msra.mxu0 %v1380
  %1403 = vmatprep.subr.mxu0 0.0
  %1404 = vmatpush1.msra.mxu0 %v1399
  %1405 = vmatprep.subr.mxu0 0.0
  %1406 = vmatpush1.msra.mxu0 0.0
  %1407 = vmatprep.subr.mxu0 0.0
  %1408 = vmatpush1.msra.mxu0 0.0
  %1409 = vmatprep.subr.mxu0 0.0
  %1410 = vmatpush1.msra.mxu0 0.0
  %1411 = vmatprep.subr.mxu0 0.0
  %1412 = vmatpush1.msra.mxu0 0.0
  %1413 = vmatprep.subr.mxu0 0.0
  %1414 = vmatpush1.msra.mxu0 0.0
  %1415 = vmatprep.subr.mxu0 0.0
  %1416 = vmatpush1.msra.mxu0 0.0
  %1417 = vmatprep.subr.mxu0 0.0
  %1418 = vmatpush1.msra.mxu0 0.0
  %1419 = vmatprep.subr.mxu0 0.0
  %1420 = vmatpush1.msra.mxu0 0.0
  %1421 = vmatprep.subr.mxu0 0.0
  %1422 = vmatpush1.msra.mxu0 0.0
  %1423 = vmatprep.subr.mxu0 0.0
  %1424 = vmatpush1.msra.mxu0 0.0
  %1425 = vmatprep.subr.mxu0 0.0
  %1426 = vmatpush1.msra.mxu0 0.0
  %1427 = vmatprep.subr.mxu0 0.0
  %1428 = vmatpush1.msra.mxu0 0.0
  %1429 = vmatprep.subr.mxu0 0.0
  %1430 = vmatpush1.msra.mxu0 0.0
  %1431 = vmatprep.subr.mxu0 0.0
  %1432 = vmatpush1.msra.mxu0 0.0
  %1433 = vmatprep.subr.mxu0 0.0
  %1434 = vmatpush1.msra.mxu0 0.0
  %1435 = vmatprep.subr.mxu0 0.0
  %1436 = vmatpush1.msra.mxu0 0.0
  %1437 = vmatprep.subr.mxu0 0.0
  %1438 = vmatpush1.msra.mxu0 0.0
  %1439 = vmatprep.subr.mxu0 0.0
  %1440 = vmatpush1.msra.mxu0 0.0
  %1441 = vmatprep.subr.mxu0 0.0
  %1442 = vmatpush1.msra.mxu0 0.0
  %1443 = vmatprep.subr.mxu0 0.0
  %1444 = vmatpush1.msra.mxu0 0.0
  %1445 = vmatprep.subr.mxu0 0.0
  %1446 = vmatpush1.msra.mxu0 0.0
  %1447 = vmatprep.subr.mxu0 0.0
  %1448 = vmatpush1.msra.mxu0 0.0
  %1449 = vmatprep.subr.mxu0 0.0
  %1450 = vmatpush1.msra.mxu0 0.0
  %1451 = vmatprep.subr.mxu0 0.0
  %1452 = vmatpush1.msra.mxu0 0.0
  %1453 = vmatprep.subr.mxu0 0.0
  %1454 = vmatpush1.msra.mxu0 0.0
  %1455 = vmatprep.subr.mxu0 0.0
  %1456 = vmatpush1.msra.mxu0 0.0
  %1457 = vmatprep.subr.mxu0 0.0
  %1458 = vmatpush1.msra.mxu0 0.0
  %1459 = vmatprep.subr.mxu0 0.0
  %1460 = vmatpush1.msra.mxu0 0.0
  %1461 = vmatprep.subr.mxu0 0.0
  %1462 = vmatpush1.msra.mxu0 0.0
  %1463 = vmatprep.subr.mxu0 0.0
  %1464 = vmatpush1.msra.mxu0 0.0
  %1465 = vmatprep.mubr.f32.mxu0 0.0
  %1466 = vmatmul.mubr.f32.gmra.mrb[0].mxu0 %v1390
  %v1467 = vpop.f32.mrb[0].mxu0
  %v1468 = vadd.f32 %v1387, %v1467
  %v1469 = vpop.f32.mrb[0].mxu0
  %1470 = vmatprep.mubr.f32.mxu0 0.0
  %1471 = vmatmul.mubr.f32.gmra.mrb[0].mxu0 %v1393
  %v1472 = vpop.f32.mrb[0].mxu0
  %v1473 = vadd.f32 %v1387, %v1472
  %v1474 = vpop.f32.mrb[0].mxu0
  %1475 = vmatprep.mubr.f32.mxu0 0.0
  %1476 = vmatmul.mubr.f32.gmra.mrb[0].mxu0 %v1396
  %v1477 = vpop.f32.mrb[0].mxu0
  %v1478 = vadd.f32 %v1387, %v1477
  %v1479 = vpop.f32.mrb[0].mxu0
  %1480 = vdwg.mxu0
  %v1481 = vadd.f32 %v1037, %v1468
  %v1482 = vadd.f32 %v1038, %v1473
  %v1483 = vadd.f32 %v1039, %v1478
  %v1484 = vld [vmem:[%s45] sm:$0x1]
  %v1485 = vld [vmem:[%s47] sm:$0x1]
  %v1486 = vsel %vm267, %v1481, 0.0
  %1487 = vadd.xlane.f32.xlu0 %v1486
  %v1488 = vpop.xlane.xlu0 %1487
  %v1489 = vsel %vm267, %v1482, 0.0
  %1490 = vadd.xlane.f32.xlu0 %v1489
  %v1491 = vpop.xlane.xlu0 %1490
  %v1492 = vsel %vm714, %v1483, 0.0
  %1493 = vadd.xlane.f32.xlu0 %v1492
  %v1494 = vpop.xlane.xlu0 %1493
  %v1495 = vmul.f32 %v1488, %v718
  %v1496 = vmul.f32 %v1491, %v718
  %v1497 = vmul.f32 %v1494, %v718
  %v1498 = vsub.f32 %v1481, %v1495
  %v1499 = vsub.f32 %v1482, %v1496
  %v1500 = vsub.f32 %v1483, %v1497
  %v1501 = vmul.f32 %v1498, %v1498
  %v1502 = vmul.f32 %v1499, %v1499
  %v1503 = vmul.f32 %v1500, %v1500
  %v1504 = vsel %vm267, %v1501, 0.0
  %1505 = vadd.xlane.f32.xlu0 %v1504
  %v1506 = vpop.xlane.xlu0 %1505
  %v1507 = vsel %vm267, %v1502, 0.0
  %1508 = vadd.xlane.f32.xlu0 %v1507
  %v1509 = vpop.xlane.xlu0 %1508
  %v1510 = vsel %vm714, %v1503, 0.0
  %1511 = vadd.xlane.f32.xlu0 %v1510
  %v1512 = vpop.xlane.xlu0 %1511
  %v1513 = vmul.f32 %v1506, %v718
  %v1514 = vmul.f32 %v1509, %v718
  %v1515 = vmul.f32 %v1512, %v718
  %v1516 = vadd.f32 %v1513, 1e-05
  %v1517 = vadd.f32 %v1514, 1e-05
  %v1518 = vadd.f32 %v1515, 1e-05
  %v1519 = vrsqrt.pop %v1516
  %v1520 = vrsqrt.pop %v1517
  %v1521 = vrsqrt.pop %v1518
  %v1522 = vmul.f32 %v1498, %v1519
  %v1523 = vmul.f32 %v1499, %v1520
  %v1524 = vmul.f32 %v1500, %v1521
  %v1526 = vlaneseq
  %v1527 = vshrl.u32 %v1526, 7
  %v1528 = vsub.s32 0, %v1527
  %v1529 = vrot.slane %v1484, %v1528
  %v1531 = vmul.f32 %v1522, %v1529
  %v1532 = vmul.f32 %v1523, %v1529
  %v1533 = vmul.f32 %v1524, %v1529
  %v1535 = vlaneseq
  %v1536 = vshrl.u32 %v1535, 7
  %v1537 = vsub.s32 0, %v1536
  %v1538 = vrot.slane %v1485, %v1537
  %v1540 = vadd.f32 %v1531, %v1538
  %v1541 = vadd.f32 %v1532, %v1538
  %v1542 = vadd.f32 %v1533, %v1538
  %v1543 = vld [vmem:[%s49] sm:$0xff]
  %v1544 = vld [vmem:[%s49 + $0x8] sm:$0x3]
  %v1545 = vld [vmem:[%s51] sm:$0x1]
  %v1547 = vlaneseq
  %v1548 = vshrl.u32 %v1547, 7
  %v1549 = vsub.s32 0, %v1548
  %v1550 = vrot.slane %v1545, %v1549
  %v1553 = vsel %vm267, %v1540, 0
  %v1556 = vsel %vm267, %v1541, 0
  %v1559 = vsel %vm267, %v1542, 0
  %v1562 = vsel %vm277, %v1544, 0
  %1564 = vmatprep.subr.mxu0 0.0
  %1565 = vmatpush1.msra.mxu0 %v1543
  %1566 = vmatprep.subr.mxu0 0.0
  %1567 = vmatpush1.msra.mxu0 %v1562
  %1568 = vmatprep.subr.mxu0 0.0
  %1569 = vmatpush1.msra.mxu0 0.0
  %1570 = vmatprep.subr.mxu0 0.0
  %1571 = vmatpush1.msra.mxu0 0.0
  %1572 = vmatprep.subr.mxu0 0.0
  %1573 = vmatpush1.msra.mxu0 0.0
  %1574 = vmatprep.subr.mxu0 0.0
  %1575 = vmatpush1.msra.mxu0 0.0
  %1576 = vmatprep.subr.mxu0 0.0
  %1577 = vmatpush1.msra.mxu0 0.0
  %1578 = vmatprep.subr.mxu0 0.0
  %1579 = vmatpush1.msra.mxu0 0.0
  %1580 = vmatprep.subr.mxu0 0.0
  %1581 = vmatpush1.msra.mxu0 0.0
  %1582 = vmatprep.subr.mxu0 0.0
  %1583 = vmatpush1.msra.mxu0 0.0
  %1584 = vmatprep.subr.mxu0 0.0
  %1585 = vmatpush1.msra.mxu0 0.0
  %1586 = vmatprep.subr.mxu0 0.0
  %1587 = vmatpush1.msra.mxu0 0.0
  %1588 = vmatprep.subr.mxu0 0.0
  %1589 = vmatpush1.msra.mxu0 0.0
  %1590 = vmatprep.subr.mxu0 0.0
  %1591 = vmatpush1.msra.mxu0 0.0
  %1592 = vmatprep.subr.mxu0 0.0
  %1593 = vmatpush1.msra.mxu0 0.0
  %1594 = vmatprep.subr.mxu0 0.0
  %1595 = vmatpush1.msra.mxu0 0.0
  %1596 = vmatprep.subr.mxu0 0.0
  %1597 = vmatpush1.msra.mxu0 0.0
  %1598 = vmatprep.subr.mxu0 0.0
  %1599 = vmatpush1.msra.mxu0 0.0
  %1600 = vmatprep.subr.mxu0 0.0
  %1601 = vmatpush1.msra.mxu0 0.0
  %1602 = vmatprep.subr.mxu0 0.0
  %1603 = vmatpush1.msra.mxu0 0.0
  %1604 = vmatprep.subr.mxu0 0.0
  %1605 = vmatpush1.msra.mxu0 0.0
  %1606 = vmatprep.subr.mxu0 0.0
  %1607 = vmatpush1.msra.mxu0 0.0
  %1608 = vmatprep.subr.mxu0 0.0
  %1609 = vmatpush1.msra.mxu0 0.0
  %1610 = vmatprep.subr.mxu0 0.0
  %1611 = vmatpush1.msra.mxu0 0.0
  %1612 = vmatprep.subr.mxu0 0.0
  %1613 = vmatpush1.msra.mxu0 0.0
  %1614 = vmatprep.subr.mxu0 0.0
  %1615 = vmatpush1.msra.mxu0 0.0
  %1616 = vmatprep.subr.mxu0 0.0
  %1617 = vmatpush1.msra.mxu0 0.0
  %1618 = vmatprep.subr.mxu0 0.0
  %1619 = vmatpush1.msra.mxu0 0.0
  %1620 = vmatprep.subr.mxu0 0.0
  %1621 = vmatpush1.msra.mxu0 0.0
  %1622 = vmatprep.subr.mxu0 0.0
  %1623 = vmatpush1.msra.mxu0 0.0
  %1624 = vmatprep.subr.mxu0 0.0
  %1625 = vmatpush1.msra.mxu0 0.0
  %1626 = vmatprep.subr.mxu0 0.0
  %1627 = vmatpush1.msra.mxu0 0.0
  %1628 = vmatprep.mubr.f32.mxu0 0.0
  %1629 = vmatmul.mubr.f32.gmra.mrb[0].mxu0 %v1553
  %v1630 = vpop.f32.mrb[0].mxu0
  %v1631 = vadd.f32 %v1550, %v1630
  %v1632 = vpop.f32.mrb[0].mxu0
  %1633 = vmatprep.mubr.f32.mxu0 0.0
  %1634 = vmatmul.mubr.f32.gmra.mrb[0].mxu0 %v1556
  %v1635 = vpop.f32.mrb[0].mxu0
  %v1636 = vadd.f32 %v1550, %v1635
  %v1637 = vpop.f32.mrb[0].mxu0
  %1638 = vmatprep.mubr.f32.mxu0 0.0
  %1639 = vmatmul.mubr.f32.gmra.mrb[0].mxu0 %v1559
  %v1640 = vpop.f32.mrb[0].mxu0
  %v1641 = vadd.f32 %v1550, %v1640
  %v1642 = vpop.f32.mrb[0].mxu0
  %1643 = vdwg.mxu0
  %vm1644 = vcmp.ge.f32.partialorder %v1631, 0.0
  %vm1645 = vcmp.ge.f32.partialorder %v1636, 0.0
  %vm1646 = vcmp.ge.f32.partialorder %v1641, 0.0
  %v1647 = vmul.f32 %v1631, 0.2
  %v1648 = vmul.f32 %v1636, 0.2
  %v1649 = vmul.f32 %v1641, 0.2
  %v1650 = vsel %vm1644, %v1631, %v1647
  %v1651 = vsel %vm1645, %v1636, %v1648
  %v1652 = vsel %vm1646, %v1641, %v1649
  %v1653 = vld [vmem:[%s53] sm:$0xff]
  %v1654 = vld [vmem:[%s53 + $0x8] sm:$0xff]
  %v1655 = vld [vmem:[%s53 + $0x10] sm:$0xff]
  %v1656 = vld [vmem:[%s53 + $0x18] sm:$0xff]
  %v1657 = vld [vmem:[%s55] sm:$0x1]
  %v1659 = vlaneseq
  %v1660 = vshrl.u32 %v1659, 7
  %v1661 = vsub.s32 0, %v1660
  %v1662 = vrot.slane %v1657, %v1661
  %v1665 = vsel %vm888, %v1650, 0
  %v1668 = vsel %vm888, %v1651, 0
  %v1671 = vsel %vm888, %v1652, 0
  %1673 = vmatprep.subr.mxu0 0.0
  %1674 = vmatpush1.msra.mxu0 %v1653
  %1675 = vmatprep.subr.mxu0 0.0
  %1676 = vmatpush1.msra.mxu0 %v1654
  %1677 = vmatprep.subr.mxu0 0.0
  %1678 = vmatpush1.msra.mxu0 %v1655
  %1679 = vmatprep.subr.mxu0 0.0
  %1680 = vmatpush1.msra.mxu0 %v1656
  %1681 = vmatprep.subr.mxu0 0.0
  %1682 = vmatpush1.msra.mxu0 0.0
  %1683 = vmatprep.subr.mxu0 0.0
  %1684 = vmatpush1.msra.mxu0 0.0
  %1685 = vmatprep.subr.mxu0 0.0
  %1686 = vmatpush1.msra.mxu0 0.0
  %1687 = vmatprep.subr.mxu0 0.0
  %1688 = vmatpush1.msra.mxu0 0.0
  %1689 = vmatprep.subr.mxu0 0.0
  %1690 = vmatpush1.msra.mxu0 0.0
  %1691 = vmatprep.subr.mxu0 0.0
  %1692 = vmatpush1.msra.mxu0 0.0
  %1693 = vmatprep.subr.mxu0 0.0
  %1694 = vmatpush1.msra.mxu0 0.0
  %1695 = vmatprep.subr.mxu0 0.0
  %1696 = vmatpush1.msra.mxu0 0.0
  %1697 = vmatprep.subr.mxu0 0.0
  %1698 = vmatpush1.msra.mxu0 0.0
  %1699 = vmatprep.subr.mxu0 0.0
  %1700 = vmatpush1.msra.mxu0 0.0
  %1701 = vmatprep.subr.mxu0 0.0
  %1702 = vmatpush1.msra.mxu0 0.0
  %1703 = vmatprep.subr.mxu0 0.0
  %1704 = vmatpush1.msra.mxu0 0.0
  %1705 = vmatprep.subr.mxu0 0.0
  %1706 = vmatpush1.msra.mxu0 0.0
  %1707 = vmatprep.subr.mxu0 0.0
  %1708 = vmatpush1.msra.mxu0 0.0
  %1709 = vmatprep.subr.mxu0 0.0
  %1710 = vmatpush1.msra.mxu0 0.0
  %1711 = vmatprep.subr.mxu0 0.0
  %1712 = vmatpush1.msra.mxu0 0.0
  %1713 = vmatprep.subr.mxu0 0.0
  %1714 = vmatpush1.msra.mxu0 0.0
  %1715 = vmatprep.subr.mxu0 0.0
  %1716 = vmatpush1.msra.mxu0 0.0
  %1717 = vmatprep.subr.mxu0 0.0
  %1718 = vmatpush1.msra.mxu0 0.0
  %1719 = vmatprep.subr.mxu0 0.0
  %1720 = vmatpush1.msra.mxu0 0.0
  %1721 = vmatprep.subr.mxu0 0.0
  %1722 = vmatpush1.msra.mxu0 0.0
  %1723 = vmatprep.subr.mxu0 0.0
  %1724 = vmatpush1.msra.mxu0 0.0
  %1725 = vmatprep.subr.mxu0 0.0
  %1726 = vmatpush1.msra.mxu0 0.0
  %1727 = vmatprep.subr.mxu0 0.0
  %1728 = vmatpush1.msra.mxu0 0.0
  %1729 = vmatprep.subr.mxu0 0.0
  %1730 = vmatpush1.msra.mxu0 0.0
  %1731 = vmatprep.subr.mxu0 0.0
  %1732 = vmatpush1.msra.mxu0 0.0
  %1733 = vmatprep.subr.mxu0 0.0
  %1734 = vmatpush1.msra.mxu0 0.0
  %1735 = vmatprep.subr.mxu0 0.0
  %1736 = vmatpush1.msra.mxu0 0.0
  %1737 = vmatprep.mubr.f32.mxu0 0.0
  %1738 = vmatmul.mubr.f32.gmra.mrb[0].mxu0 %v1665
  %v1739 = vpop.f32.mrb[0].mxu0
  %v1740 = vadd.f32 %v1662, %v1739
  %v1741 = vpop.f32.mrb[0].mxu0
  %1742 = vmatprep.mubr.f32.mxu0 0.0
  %1743 = vmatmul.mubr.f32.gmra.mrb[0].mxu0 %v1668
  %v1744 = vpop.f32.mrb[0].mxu0
  %v1745 = vadd.f32 %v1662, %v1744
  %v1746 = vpop.f32.mrb[0].mxu0
  %1747 = vmatprep.mubr.f32.mxu0 0.0
  %1748 = vmatmul.mubr.f32.gmra.mrb[0].mxu0 %v1671
  %v1749 = vpop.f32.mrb[0].mxu0
  %v1750 = vadd.f32 %v1662, %v1749
  %v1751 = vpop.f32.mrb[0].mxu0
  %1752 = vdwg.mxu0
  %v1753 = vadd.f32 %v1540, %v1740
  %v1754 = vadd.f32 %v1541, %v1745
  %v1755 = vadd.f32 %v1542, %v1750
  %v1756 = vld [vmem:[%s57] sm:$0x1]
  %v1757 = vld [vmem:[%s59] sm:$0x1]
  %v1758 = vsel %vm267, %v1753, 0.0
  %1759 = vadd.xlane.f32.xlu0 %v1758
  %v1760 = vpop.xlane.xlu0 %1759
  %v1761 = vsel %vm267, %v1754, 0.0
  %1762 = vadd.xlane.f32.xlu0 %v1761
  %v1763 = vpop.xlane.xlu0 %1762
  %v1764 = vsel %vm714, %v1755, 0.0
  %1765 = vadd.xlane.f32.xlu0 %v1764
  %v1766 = vpop.xlane.xlu0 %1765
  %v1767 = vmul.f32 %v1760, %v718
  %v1768 = vmul.f32 %v1763, %v718
  %v1769 = vmul.f32 %v1766, %v718
  %v1770 = vsub.f32 %v1753, %v1767
  %v1771 = vsub.f32 %v1754, %v1768
  %v1772 = vsub.f32 %v1755, %v1769
  %v1773 = vmul.f32 %v1770, %v1770
  %v1774 = vmul.f32 %v1771, %v1771
  %v1775 = vmul.f32 %v1772, %v1772
  %v1776 = vsel %vm267, %v1773, 0.0
  %1777 = vadd.xlane.f32.xlu0 %v1776
  %v1778 = vpop.xlane.xlu0 %1777
  %v1779 = vsel %vm267, %v1774, 0.0
  %1780 = vadd.xlane.f32.xlu0 %v1779
  %v1781 = vpop.xlane.xlu0 %1780
  %v1782 = vsel %vm714, %v1775, 0.0
  %1783 = vadd.xlane.f32.xlu0 %v1782
  %v1784 = vpop.xlane.xlu0 %1783
  %v1785 = vmul.f32 %v1778, %v718
  %v1786 = vmul.f32 %v1781, %v718
  %v1787 = vmul.f32 %v1784, %v718
  %v1788 = vadd.f32 %v1785, 1e-05
  %v1789 = vadd.f32 %v1786, 1e-05
  %v1790 = vadd.f32 %v1787, 1e-05
  %v1791 = vrsqrt.pop %v1788
  %v1792 = vrsqrt.pop %v1789
  %v1793 = vrsqrt.pop %v1790
  %v1794 = vmul.f32 %v1770, %v1791
  %v1795 = vmul.f32 %v1771, %v1792
  %v1796 = vmul.f32 %v1772, %v1793
  %v1798 = vlaneseq
  %v1799 = vshrl.u32 %v1798, 7
  %v1800 = vsub.s32 0, %v1799
  %v1801 = vrot.slane %v1756, %v1800
  %v1803 = vmul.f32 %v1794, %v1801
  %v1804 = vmul.f32 %v1795, %v1801
  %v1805 = vmul.f32 %v1796, %v1801
  %v1807 = vlaneseq
  %v1808 = vshrl.u32 %v1807, 7
  %v1809 = vsub.s32 0, %v1808
  %v1810 = vrot.slane %v1757, %v1809
  %v1812 = vadd.f32 %v1803, %v1810
  %v1813 = vadd.f32 %v1804, %v1810
  %v1814 = vadd.f32 %v1805, %v1810
  %v1815 = vld [vmem:[%s7] sm:$0x3]
  %v1817 = vsel %vm468, %v1815, 0
  %v1820 = vsel %vm277, %v1814, 0
  %1822 = vmatprep.subr.mxu0 0.0
  %1823 = vmatpush1.msra.mxu0 %v1812
  %1824 = vmatprep.subr.mxu0 0.0
  %1825 = vmatpush1.msra.mxu0 %v1813
  %1826 = vmatprep.subr.mxu0 0.0
  %1827 = vmatpush1.msra.mxu0 %v1820
  %1828 = vmatprep.subr.mxu0 0.0
  %1829 = vmatpush1.msra.mxu0 0.0
  %1830 = vmatprep.subr.mxu0 0.0
  %1831 = vmatpush1.msra.mxu0 0.0
  %1832 = vmatprep.subr.mxu0 0.0
  %1833 = vmatpush1.msra.mxu0 0.0
  %1834 = vmatprep.subr.mxu0 0.0
  %1835 = vmatpush1.msra.mxu0 0.0
  %1836 = vmatprep.subr.mxu0 0.0
  %1837 = vmatpush1.msra.mxu0 0.0
  %1838 = vmatprep.subr.mxu0 0.0
  %1839 = vmatpush1.msra.mxu0 0.0
  %1840 = vmatprep.subr.mxu0 0.0
  %1841 = vmatpush1.msra.mxu0 0.0
  %1842 = vmatprep.subr.mxu0 0.0
  %1843 = vmatpush1.msra.mxu0 0.0
  %1844 = vmatprep.subr.mxu0 0.0
  %1845 = vmatpush1.msra.mxu0 0.0
  %1846 = vmatprep.subr.mxu0 0.0
  %1847 = vmatpush1.msra.mxu0 0.0
  %1848 = vmatprep.subr.mxu0 0.0
  %1849 = vmatpush1.msra.mxu0 0.0
  %1850 = vmatprep.subr.mxu0 0.0
  %1851 = vmatpush1.msra.mxu0 0.0
  %1852 = vmatprep.subr.mxu0 0.0
  %1853 = vmatpush1.msra.mxu0 0.0
  %1854 = vmatprep.subr.mxu0 0.0
  %1855 = vmatpush1.msra.mxu0 0.0
  %1856 = vmatprep.subr.mxu0 0.0
  %1857 = vmatpush1.msra.mxu0 0.0
  %1858 = vmatprep.subr.mxu0 0.0
  %1859 = vmatpush1.msra.mxu0 0.0
  %1860 = vmatprep.subr.mxu0 0.0
  %1861 = vmatpush1.msra.mxu0 0.0
  %1862 = vmatprep.subr.mxu0 0.0
  %1863 = vmatpush1.msra.mxu0 0.0
  %1864 = vmatprep.subr.mxu0 0.0
  %1865 = vmatpush1.msra.mxu0 0.0
  %1866 = vmatprep.subr.mxu0 0.0
  %1867 = vmatpush1.msra.mxu0 0.0
  %1868 = vmatprep.subr.mxu0 0.0
  %1869 = vmatpush1.msra.mxu0 0.0
  %1870 = vmatprep.subr.mxu0 0.0
  %1871 = vmatpush1.msra.mxu0 0.0
  %1872 = vmatprep.subr.mxu0 0.0
  %1873 = vmatpush1.msra.mxu0 0.0
  %1874 = vmatprep.subr.mxu0 0.0
  %1875 = vmatpush1.msra.mxu0 0.0
  %1876 = vmatprep.subr.mxu0 0.0
  %1877 = vmatpush1.msra.mxu0 0.0
  %1878 = vmatprep.subr.mxu0 0.0
  %1879 = vmatpush1.msra.mxu0 0.0
  %1880 = vmatprep.subr.mxu0 0.0
  %1881 = vmatpush1.msra.mxu0 0.0
  %1882 = vmatprep.subr.mxu0 0.0
  %1883 = vmatpush1.msra.mxu0 0.0
  %1884 = vmatprep.subr.mxu0 0.0
  %1885 = vmatpush1.msra.mxu0 0.0
  %1886 = vmatprep.mubr.f32.mxu0 0.0
  %1887 = vmatmul.mubr.f32.gmra.mrb[0].mxu0 %v1817
  %v1888 = vpop.f32.mrb[0].mxu0
  %v1889 = vadd.f32 0.0, %v1888
  %v1890 = vpop.f32.mrb[0].mxu0
  %1891 = vdwg.mxu0
  %v1892 = vld [vmem:[%s61] sm:$0xff]
  %v1893 = vld [vmem:[%s61 + $0x8] sm:$0x3]
  %v1894 = vld [vmem:[%s63] sm:$0x1]
  %v1896 = vlaneseq
  %v1897 = vshrl.u32 %v1896, 7
  %v1898 = vsub.s32 0, %v1897
  %v1899 = vrot.slane %v1894, %v1898
  %v1902 = vsel %vm267, %v1889, 0
  %v1905 = vsel %vm277, %v1893, 0
  %1907 = vmatprep.subr.mxu0 0.0
  %1908 = vmatpush1.msra.mxu0 %v1892
  %1909 = vmatprep.subr.mxu0 0.0
  %1910 = vmatpush1.msra.mxu0 %v1905
  %1911 = vmatprep.subr.mxu0 0.0
  %1912 = vmatpush1.msra.mxu0 0.0
  %1913 = vmatprep.subr.mxu0 0.0
  %1914 = vmatpush1.msra.mxu0 0.0
  %1915 = vmatprep.subr.mxu0 0.0
  %1916 = vmatpush1.msra.mxu0 0.0
  %1917 = vmatprep.subr.mxu0 0.0
  %1918 = vmatpush1.msra.mxu0 0.0
  %1919 = vmatprep.subr.mxu0 0.0
  %1920 = vmatpush1.msra.mxu0 0.0
  %1921 = vmatprep.subr.mxu0 0.0
  %1922 = vmatpush1.msra.mxu0 0.0
  %1923 = vmatprep.subr.mxu0 0.0
  %1924 = vmatpush1.msra.mxu0 0.0
  %1925 = vmatprep.subr.mxu0 0.0
  %1926 = vmatpush1.msra.mxu0 0.0
  %1927 = vmatprep.subr.mxu0 0.0
  %1928 = vmatpush1.msra.mxu0 0.0
  %1929 = vmatprep.subr.mxu0 0.0
  %1930 = vmatpush1.msra.mxu0 0.0
  %1931 = vmatprep.subr.mxu0 0.0
  %1932 = vmatpush1.msra.mxu0 0.0
  %1933 = vmatprep.subr.mxu0 0.0
  %1934 = vmatpush1.msra.mxu0 0.0
  %1935 = vmatprep.subr.mxu0 0.0
  %1936 = vmatpush1.msra.mxu0 0.0
  %1937 = vmatprep.subr.mxu0 0.0
  %1938 = vmatpush1.msra.mxu0 0.0
  %1939 = vmatprep.subr.mxu0 0.0
  %1940 = vmatpush1.msra.mxu0 0.0
  %1941 = vmatprep.subr.mxu0 0.0
  %1942 = vmatpush1.msra.mxu0 0.0
  %1943 = vmatprep.subr.mxu0 0.0
  %1944 = vmatpush1.msra.mxu0 0.0
  %1945 = vmatprep.subr.mxu0 0.0
  %1946 = vmatpush1.msra.mxu0 0.0
  %1947 = vmatprep.subr.mxu0 0.0
  %1948 = vmatpush1.msra.mxu0 0.0
  %1949 = vmatprep.subr.mxu0 0.0
  %1950 = vmatpush1.msra.mxu0 0.0
  %1951 = vmatprep.subr.mxu0 0.0
  %1952 = vmatpush1.msra.mxu0 0.0
  %1953 = vmatprep.subr.mxu0 0.0
  %1954 = vmatpush1.msra.mxu0 0.0
  %1955 = vmatprep.subr.mxu0 0.0
  %1956 = vmatpush1.msra.mxu0 0.0
  %1957 = vmatprep.subr.mxu0 0.0
  %1958 = vmatpush1.msra.mxu0 0.0
  %1959 = vmatprep.subr.mxu0 0.0
  %1960 = vmatpush1.msra.mxu0 0.0
  %1961 = vmatprep.subr.mxu0 0.0
  %1962 = vmatpush1.msra.mxu0 0.0
  %1963 = vmatprep.subr.mxu0 0.0
  %1964 = vmatpush1.msra.mxu0 0.0
  %1965 = vmatprep.subr.mxu0 0.0
  %1966 = vmatpush1.msra.mxu0 0.0
  %1967 = vmatprep.subr.mxu0 0.0
  %1968 = vmatpush1.msra.mxu0 0.0
  %1969 = vmatprep.subr.mxu0 0.0
  %1970 = vmatpush1.msra.mxu0 0.0
  %1971 = vmatprep.mubr.f32.mxu0 0.0
  %1972 = vmatmul.mubr.f32.gmra.mrb[0].mxu0 %v1902
  %v1973 = vpop.f32.mrb[0].mxu0
  %v1974 = vadd.f32 %v1899, %v1973
  %v1975 = vpop.f32.mrb[0].mxu0
  %1976 = vdwg.mxu0
  %vm1977 = vcmp.ge.f32.partialorder %v1974, 0.0
  %v1978 = vmul.f32 %v1974, 0.2
  %v1979 = vsel %vm1977, %v1974, %v1978
  %v1980 = vld [vmem:[%s65] sm:$0xff]
  %v1981 = vld [vmem:[%s65 + $0x8] sm:$0xff]
  %v1982 = vld [vmem:[%s65 + $0x10] sm:$0xff]
  %v1983 = vld [vmem:[%s65 + $0x18] sm:$0xff]
  %v1984 = vld [vmem:[%s65 + $0x20] sm:$0xff]
  %v1985 = vld [vmem:[%s65 + $0x28] sm:$0xff]
  %v1986 = vld [vmem:[%s65 + $0x30] sm:$0xff]
  %v1987 = vld [vmem:[%s65 + $0x38] sm:$0xff]
  %v1988 = vld [vmem:[%s67] sm:$0x1]
  %v1990 = vlaneseq
  %v1991 = vshrl.u32 %v1990, 7
  %v1992 = vsub.s32 0, %v1991
  %v1993 = vrot.slane %v1988, %v1992
  %vm1995 = vcmask 523264
  %v1997 = vsel %vm1995, %v1979, 0
  %1999 = vmatprep.subr.mxu0 0.0
  %2000 = vmatpush1.msra.mxu0 %v1980
  %2001 = vmatprep.subr.mxu0 0.0
  %2002 = vmatpush1.msra.mxu0 %v1981
  %2003 = vmatprep.subr.mxu0 0.0
  %2004 = vmatpush1.msra.mxu0 %v1982
  %2005 = vmatprep.subr.mxu0 0.0
  %2006 = vmatpush1.msra.mxu0 %v1983
  %2007 = vmatprep.subr.mxu0 0.0
  %2008 = vmatpush1.msra.mxu0 %v1984
  %2009 = vmatprep.subr.mxu0 0.0
  %2010 = vmatpush1.msra.mxu0 %v1985
  %2011 = vmatprep.subr.mxu0 0.0
  %2012 = vmatpush1.msra.mxu0 %v1986
  %2013 = vmatprep.subr.mxu0 0.0
  %2014 = vmatpush1.msra.mxu0 %v1987
  %2015 = vmatprep.subr.mxu0 0.0
  %2016 = vmatpush1.msra.mxu0 0.0
  %2017 = vmatprep.subr.mxu0 0.0
  %2018 = vmatpush1.msra.mxu0 0.0
  %2019 = vmatprep.subr.mxu0 0.0
  %2020 = vmatpush1.msra.mxu0 0.0
  %2021 = vmatprep.subr.mxu0 0.0
  %2022 = vmatpush1.msra.mxu0 0.0
  %2023 = vmatprep.subr.mxu0 0.0
  %2024 = vmatpush1.msra.mxu0 0.0
  %2025 = vmatprep.subr.mxu0 0.0
  %2026 = vmatpush1.msra.mxu0 0.0
  %2027 = vmatprep.subr.mxu0 0.0
  %2028 = vmatpush1.msra.mxu0 0.0
  %2029 = vmatprep.subr.mxu0 0.0
  %2030 = vmatpush1.msra.mxu0 0.0
  %2031 = vmatprep.subr.mxu0 0.0
  %2032 = vmatpush1.msra.mxu0 0.0
  %2033 = vmatprep.subr.mxu0 0.0
  %2034 = vmatpush1.msra.mxu0 0.0
  %2035 = vmatprep.subr.mxu0 0.0
  %2036 = vmatpush1.msra.mxu0 0.0
  %2037 = vmatprep.subr.mxu0 0.0
  %2038 = vmatpush1.msra.mxu0 0.0
  %2039 = vmatprep.subr.mxu0 0.0
  %2040 = vmatpush1.msra.mxu0 0.0
  %2041 = vmatprep.subr.mxu0 0.0
  %2042 = vmatpush1.msra.mxu0 0.0
  %2043 = vmatprep.subr.mxu0 0.0
  %2044 = vmatpush1.msra.mxu0 0.0
  %2045 = vmatprep.subr.mxu0 0.0
  %2046 = vmatpush1.msra.mxu0 0.0
  %2047 = vmatprep.subr.mxu0 0.0
  %2048 = vmatpush1.msra.mxu0 0.0
  %2049 = vmatprep.subr.mxu0 0.0
  %2050 = vmatpush1.msra.mxu0 0.0
  %2051 = vmatprep.subr.mxu0 0.0
  %2052 = vmatpush1.msra.mxu0 0.0
  %2053 = vmatprep.subr.mxu0 0.0
  %2054 = vmatpush1.msra.mxu0 0.0
  %2055 = vmatprep.subr.mxu0 0.0
  %2056 = vmatpush1.msra.mxu0 0.0
  %2057 = vmatprep.subr.mxu0 0.0
  %2058 = vmatpush1.msra.mxu0 0.0
  %2059 = vmatprep.subr.mxu0 0.0
  %2060 = vmatpush1.msra.mxu0 0.0
  %2061 = vmatprep.subr.mxu0 0.0
  %2062 = vmatpush1.msra.mxu0 0.0
  %2063 = vmatprep.mubr.f32.mxu0 0.0
  %2064 = vmatmul.mubr.f32.gmra.mrb[0].mxu0 %v1997
  %v2065 = vpop.f32.mrb[0].mxu0
  %v2066 = vadd.f32 %v1993, %v2065
  %v2067 = vpop.f32.mrb[0].mxu0
  %2068 = vdwg.mxu0
  %vm2069 = vcmp.ge.f32.partialorder %v2066, 0.0
  %v2070 = vmul.f32 %v2066, 0.2
  %v2071 = vsel %vm2069, %v2066, %v2070
  %v2072 = vld [vmem:[%s69] sm:$0xff]
  %v2073 = vld [vmem:[%s69 + $0x8] sm:$0xff]
  %v2074 = vld [vmem:[%s69 + $0x10] sm:$0xff]
  %v2075 = vld [vmem:[%s69 + $0x18] sm:$0xff]
  %v2076 = vld [vmem:[#allocation2] sm:$0x1]
  %v2078 = vlaneseq
  %v2079 = vshrl.u32 %v2078, 7
  %v2080 = vsub.s32 0, %v2079
  %v2081 = vrot.slane %v2076, %v2080
  %v2084 = vsel %vm888, %v2071, 0
  %2086 = vmatprep.subr.mxu0 0.0
  %2087 = vmatpush1.msra.mxu0 %v2072
  %2088 = vmatprep.subr.mxu0 0.0
  %2089 = vmatpush1.msra.mxu0 %v2073
  %2090 = vmatprep.subr.mxu0 0.0
  %2091 = vmatpush1.msra.mxu0 %v2074
  %2092 = vmatprep.subr.mxu0 0.0
  %2093 = vmatpush1.msra.mxu0 %v2075
  %2094 = vmatprep.subr.mxu0 0.0
  %2095 = vmatpush1.msra.mxu0 0.0
  %2096 = vmatprep.subr.mxu0 0.0
  %2097 = vmatpush1.msra.mxu0 0.0
  %2098 = vmatprep.subr.mxu0 0.0
  %2099 = vmatpush1.msra.mxu0 0.0
  %2100 = vmatprep.subr.mxu0 0.0
  %2101 = vmatpush1.msra.mxu0 0.0
  %2102 = vmatprep.subr.mxu0 0.0
  %2103 = vmatpush1.msra.mxu0 0.0
  %2104 = vmatprep.subr.mxu0 0.0
  %2105 = vmatpush1.msra.mxu0 0.0
  %2106 = vmatprep.subr.mxu0 0.0
  %2107 = vmatpush1.msra.mxu0 0.0
  %2108 = vmatprep.subr.mxu0 0.0
  %2109 = vmatpush1.msra.mxu0 0.0
  %2110 = vmatprep.subr.mxu0 0.0
  %2111 = vmatpush1.msra.mxu0 0.0
  %2112 = vmatprep.subr.mxu0 0.0
  %2113 = vmatpush1.msra.mxu0 0.0
  %2114 = vmatprep.subr.mxu0 0.0
  %2115 = vmatpush1.msra.mxu0 0.0
  %2116 = vmatprep.subr.mxu0 0.0
  %2117 = vmatpush1.msra.mxu0 0.0
  %2118 = vmatprep.subr.mxu0 0.0
  %2119 = vmatpush1.msra.mxu0 0.0
  %2120 = vmatprep.subr.mxu0 0.0
  %2121 = vmatpush1.msra.mxu0 0.0
  %2122 = vmatprep.subr.mxu0 0.0
  %2123 = vmatpush1.msra.mxu0 0.0
  %2124 = vmatprep.subr.mxu0 0.0
  %2125 = vmatpush1.msra.mxu0 0.0
  %2126 = vmatprep.subr.mxu0 0.0
  %2127 = vmatpush1.msra.mxu0 0.0
  %2128 = vmatprep.subr.mxu0 0.0
  %2129 = vmatpush1.msra.mxu0 0.0
  %2130 = vmatprep.subr.mxu0 0.0
  %2131 = vmatpush1.msra.mxu0 0.0
  %2132 = vmatprep.subr.mxu0 0.0
  %2133 = vmatpush1.msra.mxu0 0.0
  %2134 = vmatprep.subr.mxu0 0.0
  %2135 = vmatpush1.msra.mxu0 0.0
  %2136 = vmatprep.subr.mxu0 0.0
  %2137 = vmatpush1.msra.mxu0 0.0
  %2138 = vmatprep.subr.mxu0 0.0
  %2139 = vmatpush1.msra.mxu0 0.0
  %2140 = vmatprep.subr.mxu0 0.0
  %2141 = vmatpush1.msra.mxu0 0.0
  %2142 = vmatprep.subr.mxu0 0.0
  %2143 = vmatpush1.msra.mxu0 0.0
  %2144 = vmatprep.subr.mxu0 0.0
  %2145 = vmatpush1.msra.mxu0 0.0
  %2146 = vmatprep.subr.mxu0 0.0
  %2147 = vmatpush1.msra.mxu0 0.0
  %2148 = vmatprep.subr.mxu0 0.0
  %2149 = vmatpush1.msra.mxu0 0.0
  %2150 = vmatprep.mubr.f32.mxu0 0.0
  %2151 = vmatmul.mubr.f32.gmra.mrb[0].mxu0 %v2084
  %v2152 = vpop.f32.mrb[0].mxu0
  %v2153 = vadd.f32 %v2081, %v2152
  %v2154 = vpop.f32.mrb[0].mxu0
  %2155 = vdwg.mxu0
  %vm2156 = vcmask 1024
  %2157 = vst.msk [vmem:[%s73] sm:$0x3] %vm2156, %v2153
  // Predicated region
  $region146: #{disc_forward.1} parent=0 // pred_check
    _
  $region147: #{disc_forward.1} parent=0 // pred_check_branch
    %2159 = sbr.rel (0) target = $region149
  $region148: #{disc_forward.1} parent=0 // pred_region
    _
  $region149: #{disc_forward.1} parent=0 // pred_fallthru
    _
  // Predicated region
  $region150: #{disc_forward.1} parent=0 // pred_check
    _
  $region151: #{disc_forward.1} parent=0 // pred_check_branch
    %2161 = sbr.rel (0) target = $region153
  $region152: #{disc_forward.1} parent=0 // pred_region
    _
  $region153: #{disc_forward.1} parent=0 // pred_fallthru
    _

</llo_original>
